<compile_context>
chip_gen: v6e
topology: v6e:2x2x1
jax: 0.10.0
libtpu: 0.0.40
codegen_flags: <defaults>
</compile_context>

<pallas_src>
import math

import jax
import jax.numpy as jnp
from jax.experimental import pallas as pl
from jax.experimental.pallas import tpu as pltpu

# ----------------------------- config (small) -------------------------------
B = 2            # batch
SQ = 8           # query sequence length (input_tensor)
SK = 16          # key/value sequence length (ctx_tensor)
H = 32           # hidden_size
HC = 32          # ctx_dim (None -> hidden_size in the reference module)
NH = 4           # num_attention_heads
D = H // NH      # attention_head_size
LN_EPS = 1e-12
F32 = jnp.float32

# MXU operand dtype.  Kept f32 at these toy sizes so the correctness check is
# tight; switch to jnp.bfloat16 at production sizes on v6e/v7x (bf16-native
# MXU) -- accumulation stays f32 via preferred_element_type either way.
MM_DTYPE = jnp.float32


def _layernorm(x, gamma, beta, eps):
    # torch.nn.LayerNorm over the last dim, biased variance.
    mean = jnp.mean(x, axis=-1, keepdims=True)
    var = jnp.mean((x - mean) ** 2, axis=-1, keepdims=True)
    return (x - mean) * jax.lax.rsqrt(var + eps) * gamma + beta


def _mm(a, b):
    return jnp.dot(a.astype(MM_DTYPE), b.astype(MM_DTYPE),
                   preferred_element_type=F32)


# ------------------------------ Pallas kernel --------------------------------
def bert_xattn_kernel(x_ref, c_ref, mask_ref, sel_ref,
                      wq_ref, bq_ref, wkv_ref, bkv_ref,
                      wo_ref, bo_ref, g_ref, be_ref,
                      out_ref, scores_ref):
    # One grid step == one batch element ("parallel" -> both TCs on v7x).
    x = x_ref[0]                         # (SQ, H)   input_tensor[b]
    c = c_ref[0]                         # (SK, HC)  ctx_tensor[b]
    mask = mask_ref[0]                   # (1, SK)   additive mask[b]
    sel = sel_ref[...]                   # (NH, 1, H) head-selection mask

    # Merged, lane-dense projections (1/sqrt(D) already folded into wq/bq).
    q = _mm(x, wq_ref[...]) + bq_ref[...]        # (SQ, H)
    kv = _mm(c, wkv_ref[...]) + bkv_ref[...]     # (SK, 2H) fused [K | V]
    k = kv[:, :H]                                # (SK, H)
    v = kv[:, H:]                                # (SK, H)

    # Block-diagonal head contraction: rows of `a` are query rows masked to a
    # single head's column block, so one dense (NH*SQ, H) x (SK, H)^T matmul
    # yields every head's score plane at once (no per-head loop, no transpose).
    a = (q[None, :, :] * sel).reshape(NH * SQ, H)
    s = jnp.einsum('nh,kh->nk', a.astype(MM_DTYPE), k.astype(MM_DTYPE),
                   preferred_element_type=F32) + mask        # (NH*SQ, SK)
    scores_ref[...] = s                                      # single dense store

    # Softmax over keys (rows are (head, query) pairs); divide on the EUP.
    e = jnp.exp(s - jnp.max(s, axis=-1, keepdims=True))
    p = e * pl.reciprocal(jnp.sum(e, axis=-1, keepdims=True), approx=True)

    # probs @ V for all heads in one matmul; merge heads back with the same
    # selection mask (cheap leading-axis reduce) instead of a concat/relayout.
    ctx_full = _mm(p, v).reshape(NH, SQ, H)                  # (NH, SQ, H)
    ctx = jnp.sum(ctx_full * sel, axis=0)                    # (SQ, H)

    # BertSelfOutput: single merged dense + residual + LayerNorm.
    h1 = _mm(ctx, wo_ref[...]) + bo_ref[...] + x
    out_ref[...] = _layernorm(h1, g_ref[...], be_ref[...], LN_EPS)


# --------------------------------- wrapper -----------------------------------
def bert_x_attention(input_tensor, ctx_tensor, ctx_att_mask, params):
    """input_tensor: (B,SQ,H); ctx_tensor: (B,SK,HC); ctx_att_mask: (B,1,SK) additive."""
    wq, bq, wk, bk, wv, bv, wo, bo, gamma, beta = params

    # Trace-time weight prep: fold the 1/sqrt(D) score scale into the query
    # projection and fuse K|V into one lane-dense weight.
    scale = 1.0 / math.sqrt(D)
    wq_s = (wq * scale).astype(F32)                      # (H, H)
    bq_s = (bq * scale).reshape(1, H)
    wkv = jnp.concatenate([wk, wv], axis=1)              # (HC, 2H)
    bkv = jnp.concatenate([bk, bv]).reshape(1, 2 * H)
    bo2 = bo.reshape(1, H)
    g2 = gamma.reshape(1, H)
    be2 = beta.reshape(1, H)
    # head_sel[h, 0, h*D + d] = 1 : selects head h's column block.
    head_sel = jnp.repeat(jnp.eye(NH, dtype=F32), D, axis=1).reshape(NH, 1, H)

    inputs = (input_tensor, ctx_tensor, ctx_att_mask, head_sel,
              wq_s, bq_s, wkv, bkv, wo, bo2, g2, be2)

    def const_spec(shape):
        return pl.BlockSpec(shape, lambda b, _z=(0,) * len(shape): _z)

    in_specs = [
        pl.BlockSpec((1, SQ, H), lambda b: (b, 0, 0)),     # x: per-batch block
        pl.BlockSpec((1, SK, HC), lambda b: (b, 0, 0)),    # ctx
        pl.BlockSpec((1, 1, SK), lambda b: (b, 0, 0)),     # additive mask
        const_spec((NH, 1, H)),                            # head_sel
        const_spec((H, H)), const_spec((1, H)),            # wq_s, bq_s
        const_spec((HC, 2 * H)), const_spec((1, 2 * H)),   # wkv, bkv
        const_spec((H, H)), const_spec((1, H)),            # wo, bo
        const_spec((1, H)), const_spec((1, H)),            # gamma, beta
    ]
    # Outputs as 2-D slabs (reshaped for free below).  TODO(synk): at
    # production sizes make the last dims multiples of 128 for unmasked stores.
    out_specs = (
        pl.BlockSpec((SQ, H), lambda b: (b, 0)),               # out  (B*SQ, H)
        pl.BlockSpec((NH * SQ, SK), lambda b: (b, 0)),         # scores (B*NH*SQ, SK)
    )
    out_shape = (jax.ShapeDtypeStruct((B * SQ, H), F32),
                 jax.ShapeDtypeStruct((B * NH * SQ, SK), F32))

    fn = pl.pallas_call(
        bert_xattn_kernel,
        out_shape=out_shape,
        grid=(B,),
        in_specs=in_specs,
        out_specs=out_specs,
        compiler_params=pltpu.CompilerParams(
            dimension_semantics=("parallel",)),
    )
    out_flat, scores_flat = fn(*inputs)
    return out_flat.reshape(B, SQ, H), scores_flat.reshape(B, NH, SQ, SK)


# --------------------------- reference (plain JAX) ----------------------------
def bert_x_attention_ref(x, ctx, mask, params):
    wq, bq, wk, bk, wv, bv, wo, bo, gamma, beta = params
    q = x @ wq + bq                                   # (B,SQ,H)
    k = ctx @ wk + bk                                 # (B,SK,H)
    v = ctx @ wv + bv
    q = q.reshape(B, SQ, NH, D).transpose(0, 2, 1, 3)
    k = k.reshape(B, SK, NH, D).transpose(0, 2, 1, 3)
    v = v.reshape(B, SK, NH, D).transpose(0, 2, 1, 3)
    scores = jnp.einsum('bhqd,bhkd->bhqk', q, k) / math.sqrt(D)
    scores = scores + mask[:, :, None, :]             # (B,1,1,SK) broadcast
    probs = jax.nn.softmax(scores, axis=-1)
    c = jnp.einsum('bhqk,bhkd->bhqd', probs, v)
    c = c.transpose(0, 2, 1, 3).reshape(B, SQ, H)
    out = _layernorm(c @ wo + bo + x, gamma, beta, LN_EPS)
    return out, scores


# ---------------------------------- main --------------------------------------
if __name__ == "__main__":
    key = jax.random.PRNGKey(0)
    ks = jax.random.split(key, 12)

    def w(k, shape):
        # torch nn.Linear stores (out, in); we keep weights as (in, out) here.
        return 0.02 * jax.random.normal(k, shape, dtype=F32)

    wq = w(ks[0], (H, H));  bq = 0.01 * jax.random.normal(ks[1], (H,), F32)
    wk = w(ks[2], (HC, H)); bk = 0.01 * jax.random.normal(ks[3], (H,), F32)
    wv = w(ks[4], (HC, H)); bv = 0.01 * jax.random.normal(ks[5], (H,), F32)
    wo = w(ks[6], (H, H));  bo = 0.01 * jax.random.normal(ks[7], (H,), F32)
    gamma = jnp.ones((H,), F32)
    beta = jnp.zeros((H,), F32)
    params = (wq, bq, wk, bk, wv, bv, wo, bo, gamma, beta)

    x = jax.random.normal(ks[8], (B, SQ, H), dtype=F32)
    ctx = jax.random.normal(ks[9], (B, SK, HC), dtype=F32)
    # BERT extended additive mask: 0 = attend, -10000 = masked (last 3 ctx
    # positions of the second batch element are masked).
    keep = jnp.ones((B, 1, SK), F32).at[1, 0, -3:].set(0.0)
    mask = (1.0 - keep) * -10000.0

    out, scores = bert_x_attention(x, ctx, mask, params)
    jax.block_until_ready((out, scores))

    ref_out, ref_scores = bert_x_attention_ref(x, ctx, mask, params)
    assert out.shape == (B, SQ, H)
    assert scores.shape == (B, NH, SQ, SK)
    # scores are exact-math (no reciprocal); output tolerance covers the
    # approximate EUP reciprocal used for the softmax denominator.
    assert jnp.allclose(scores, ref_scores, atol=2e-4, rtol=2e-4)
    assert jnp.allclose(out, ref_out, atol=1e-3, rtol=1e-3)

    print("KERNEL_OK")
</pallas_src>

<mosaic_0001>
module attributes {stable_mosaic.version = 11 : i64} {
  func.func @bert_xattn_kernel(%arg0: i32, %arg1: memref<1x8x32xf32, #tpu.memory_space<vmem>>, %arg2: memref<1x16x32xf32, #tpu.memory_space<vmem>>, %arg3: memref<1x1x16xf32, #tpu.memory_space<vmem>>, %arg4: memref<4x1x32xf32, #tpu.memory_space<vmem>>, %arg5: memref<32x32xf32, #tpu.memory_space<vmem>>, %arg6: memref<1x32xf32, #tpu.memory_space<vmem>>, %arg7: memref<32x64xf32, #tpu.memory_space<vmem>>, %arg8: memref<1x64xf32, #tpu.memory_space<vmem>>, %arg9: memref<32x32xf32, #tpu.memory_space<vmem>>, %arg10: memref<1x32xf32, #tpu.memory_space<vmem>>, %arg11: memref<1x32xf32, #tpu.memory_space<vmem>>, %arg12: memref<1x32xf32, #tpu.memory_space<vmem>>, %arg13: memref<8x32xf32, #tpu.memory_space<vmem>>, %arg14: memref<32x16xf32, #tpu.memory_space<vmem>>) attributes {dimension_semantics = [#tpu.dimension_semantics<parallel>], iteration_bounds = array<i64: 2>, scalar_prefetch = 0 : i64, scratch_operands = 0 : i64, tpu.core_type = #tpu.core_type<tc>, window_params = [{transform_indices = @transform_0, window_bounds = array<i64: 1, 8, 32>}, {transform_indices = @transform_1, window_bounds = array<i64: 1, 16, 32>}, {transform_indices = @transform_2, window_bounds = array<i64: 1, 1, 16>}, {pipeline_mode = #tpu.pipeline_mode<synchronous>, transform_indices = @transform_3, window_bounds = array<i64: 4, 1, 32>}, {pipeline_mode = #tpu.pipeline_mode<synchronous>, transform_indices = @transform_4, window_bounds = array<i64: 32, 32>}, {pipeline_mode = #tpu.pipeline_mode<synchronous>, transform_indices = @transform_5, window_bounds = array<i64: 1, 32>}, {pipeline_mode = #tpu.pipeline_mode<synchronous>, transform_indices = @transform_6, window_bounds = array<i64: 32, 64>}, {pipeline_mode = #tpu.pipeline_mode<synchronous>, transform_indices = @transform_7, window_bounds = array<i64: 1, 64>}, {pipeline_mode = #tpu.pipeline_mode<synchronous>, transform_indices = @transform_8, window_bounds = array<i64: 32, 32>}, {pipeline_mode = #tpu.pipeline_mode<synchronous>, transform_indices = @transform_9, window_bounds = array<i64: 1, 32>}, {pipeline_mode = #tpu.pipeline_mode<synchronous>, transform_indices = @transform_10, window_bounds = array<i64: 1, 32>}, {pipeline_mode = #tpu.pipeline_mode<synchronous>, transform_indices = @transform_11, window_bounds = array<i64: 1, 32>}, {transform_indices = @transform_12, window_bounds = array<i64: 8, 32>}, {transform_indices = @transform_13, window_bounds = array<i64: 32, 16>}]} {
    %c0 = arith.constant 0 : index
    %c0_0 = arith.constant 0 : index
    %c0_1 = arith.constant 0 : index
    %0 = vector.load %arg1[%c0, %c0_0, %c0_1] : memref<1x8x32xf32, #tpu.memory_space<vmem>>, vector<1x8x32xf32>
    %1 = vector.shape_cast %0 : vector<1x8x32xf32> to vector<8x32xf32>
    %c0_2 = arith.constant 0 : index
    %c0_3 = arith.constant 0 : index
    %c0_4 = arith.constant 0 : index
    %2 = vector.load %arg2[%c0_2, %c0_3, %c0_4] : memref<1x16x32xf32, #tpu.memory_space<vmem>>, vector<1x16x32xf32>
    %3 = vector.shape_cast %2 : vector<1x16x32xf32> to vector<16x32xf32>
    %c0_5 = arith.constant 0 : index
    %c0_6 = arith.constant 0 : index
    %c0_7 = arith.constant 0 : index
    %4 = vector.load %arg3[%c0_5, %c0_6, %c0_7] : memref<1x1x16xf32, #tpu.memory_space<vmem>>, vector<1x1x16xf32>
    %5 = vector.shape_cast %4 : vector<1x1x16xf32> to vector<1x16xf32>
    %c0_8 = arith.constant 0 : index
    %c0_9 = arith.constant 0 : index
    %c0_10 = arith.constant 0 : index
    %6 = vector.load %arg4[%c0_8, %c0_9, %c0_10] : memref<4x1x32xf32, #tpu.memory_space<vmem>>, vector<4x1x32xf32>
    %c0_11 = arith.constant 0 : index
    %c0_12 = arith.constant 0 : index
    %7 = vector.load %arg5[%c0_11, %c0_12] : memref<32x32xf32, #tpu.memory_space<vmem>>, vector<32x32xf32>
    %cst = arith.constant dense<0.000000e+00> : vector<8x32xf32>
    %8 = tpu.matmul %1, %7, %cst {dimension_numbers = #tpu.dot_dimension_numbers<[1], [0], [0], [1], [0, 0, 1, 1], [], []>} : vector<8x32xf32>, vector<32x32xf32>, vector<8x32xf32> -> vector<8x32xf32>
    %c0_13 = arith.constant 0 : index
    %c0_14 = arith.constant 0 : index
    %9 = vector.load %arg6[%c0_13, %c0_14] : memref<1x32xf32, #tpu.memory_space<vmem>>, vector<1x32xf32>
    %10 = vector.broadcast %9 : vector<1x32xf32> to vector<8x32xf32>
    %11 = arith.addf %8, %10 : vector<8x32xf32>
    %c0_15 = arith.constant 0 : index
    %c0_16 = arith.constant 0 : index
    %12 = vector.load %arg7[%c0_15, %c0_16] : memref<32x64xf32, #tpu.memory_space<vmem>>, vector<32x64xf32>
    %cst_17 = arith.constant dense<0.000000e+00> : vector<16x64xf32>
    %13 = tpu.matmul %3, %12, %cst_17 {dimension_numbers = #tpu.dot_dimension_numbers<[1], [0], [0], [1], [0, 0, 1, 1], [], []>} : vector<16x32xf32>, vector<32x64xf32>, vector<16x64xf32> -> vector<16x64xf32>
    %c0_18 = arith.constant 0 : index
    %c0_19 = arith.constant 0 : index
    %14 = vector.load %arg8[%c0_18, %c0_19] : memref<1x64xf32, #tpu.memory_space<vmem>>, vector<1x64xf32>
    %15 = vector.broadcast %14 : vector<1x64xf32> to vector<16x64xf32>
    %16 = arith.addf %13, %15 : vector<16x64xf32>
    %17 = vector.extract_strided_slice %16 {offsets = [0, 0], sizes = [16, 32], strides = [1, 1]} : vector<16x64xf32> to vector<16x32xf32>
    %18 = vector.extract_strided_slice %16 {offsets = [0, 32], sizes = [16, 32], strides = [1, 1]} : vector<16x64xf32> to vector<16x32xf32>
    %19 = vector.shape_cast %11 : vector<8x32xf32> to vector<1x8x32xf32>
    %20 = vector.broadcast %19 : vector<1x8x32xf32> to vector<4x8x32xf32>
    %21 = vector.broadcast %6 : vector<4x1x32xf32> to vector<4x8x32xf32>
    %22 = arith.mulf %20, %21 : vector<4x8x32xf32>
    %23 = vector.shape_cast %22 : vector<4x8x32xf32> to vector<32x32xf32>
    "tpu.trace_start"() <{level = 10 : i32, message = "nh,kh->nk"}> : () -> ()
    %cst_20 = arith.constant dense<0.000000e+00> : vector<32x16xf32>
    %24 = tpu.matmul %23, %17, %cst_20 {dimension_numbers = #tpu.dot_dimension_numbers<[1], [1], [0], [0], [0, 0, 1, 0], [], []>} : vector<32x32xf32>, vector<16x32xf32>, vector<32x16xf32> -> vector<32x16xf32>
    "tpu.trace_stop"() : () -> ()
    %25 = vector.broadcast %5 : vector<1x16xf32> to vector<32x16xf32>
    %26 = arith.addf %24, %25 : vector<32x16xf32>
    %c0_21 = arith.constant 0 : index
    %c0_22 = arith.constant 0 : index
    %27 = vector.load %arg14[%c0_21, %c0_22] : memref<32x16xf32, #tpu.memory_space<vmem>>, vector<32x16xf32>
    tpu.vector_store %arg14[%c0_21, %c0_22], %26 {strides = array<i32>} : memref<32x16xf32, #tpu.memory_space<vmem>>, vector<32x16xf32>,
    %cst_23 = arith.constant dense<0xFF800000> : vector<32xf32>
    %28 = vector.multi_reduction <maximumf>, %26, %cst_23 [1] : vector<32x16xf32> to vector<32xf32>
    %29 = vector.shape_cast %28 : vector<32xf32> to vector<32x1xf32>
    %30 = vector.broadcast %29 : vector<32x1xf32> to vector<32x16xf32>
    %31 = arith.subf %26, %30 : vector<32x16xf32>
    %32 = math.exp %31 : vector<32x16xf32>
    %cst_24 = arith.constant dense<0.000000e+00> : vector<32xf32>
    %33 = vector.multi_reduction <add>, %32, %cst_24 [1] : vector<32x16xf32> to vector<32xf32>
    %34 = vector.shape_cast %33 : vector<32xf32> to vector<32x1xf32>
    %35 = tpu.reciprocal %34 {approx = true} : vector<32x1xf32> -> vector<32x1xf32>
    %36 = vector.broadcast %35 : vector<32x1xf32> to vector<32x16xf32>
    %37 = arith.mulf %32, %36 : vector<32x16xf32>
    %cst_25 = arith.constant dense<0.000000e+00> : vector<32x32xf32>
    %38 = tpu.matmul %37, %18, %cst_25 {dimension_numbers = #tpu.dot_dimension_numbers<[1], [0], [0], [1], [0, 0, 1, 1], [], []>} : vector<32x16xf32>, vector<16x32xf32>, vector<32x32xf32> -> vector<32x32xf32>
    %39 = vector.shape_cast %38 : vector<32x32xf32> to vector<4x8x32xf32>
    %40 = vector.broadcast %6 : vector<4x1x32xf32> to vector<4x8x32xf32>
    %41 = arith.mulf %39, %40 : vector<4x8x32xf32>
    %cst_26 = arith.constant dense<0.000000e+00> : vector<8x32xf32>
    %42 = vector.multi_reduction <add>, %41, %cst_26 [0] : vector<4x8x32xf32> to vector<8x32xf32>
    %c0_27 = arith.constant 0 : index
    %c0_28 = arith.constant 0 : index
    %43 = vector.load %arg9[%c0_27, %c0_28] : memref<32x32xf32, #tpu.memory_space<vmem>>, vector<32x32xf32>
    %cst_29 = arith.constant dense<0.000000e+00> : vector<8x32xf32>
    %44 = tpu.matmul %42, %43, %cst_29 {dimension_numbers = #tpu.dot_dimension_numbers<[1], [0], [0], [1], [0, 0, 1, 1], [], []>} : vector<8x32xf32>, vector<32x32xf32>, vector<8x32xf32> -> vector<8x32xf32>
    %c0_30 = arith.constant 0 : index
    %c0_31 = arith.constant 0 : index
    %45 = vector.load %arg10[%c0_30, %c0_31] : memref<1x32xf32, #tpu.memory_space<vmem>>, vector<1x32xf32>
    %46 = vector.broadcast %45 : vector<1x32xf32> to vector<8x32xf32>
    %47 = arith.addf %44, %46 : vector<8x32xf32>
    %48 = arith.addf %47, %1 : vector<8x32xf32>
    %c0_32 = arith.constant 0 : index
    %c0_33 = arith.constant 0 : index
    %49 = vector.load %arg11[%c0_32, %c0_33] : memref<1x32xf32, #tpu.memory_space<vmem>>, vector<1x32xf32>
    %c0_34 = arith.constant 0 : index
    %c0_35 = arith.constant 0 : index
    %50 = vector.load %arg12[%c0_34, %c0_35] : memref<1x32xf32, #tpu.memory_space<vmem>>, vector<1x32xf32>
    %cst_36 = arith.constant dense<0.000000e+00> : vector<8xf32>
    %51 = vector.multi_reduction <add>, %48, %cst_36 [1] : vector<8x32xf32> to vector<8xf32>
    %52 = vector.shape_cast %51 : vector<8xf32> to vector<8x1xf32>
    %cst_37 = arith.constant 3.200000e+01 : f32
    %53 = vector.broadcast %cst_37 : f32 to vector<8x1xf32>
    %54 = arith.divf %52, %53 : vector<8x1xf32>
    %55 = vector.broadcast %54 : vector<8x1xf32> to vector<8x32xf32>
    %56 = arith.subf %48, %55 : vector<8x32xf32>
    %57 = arith.mulf %56, %56 : vector<8x32xf32>
    %cst_38 = arith.constant dense<0.000000e+00> : vector<8xf32>
    %58 = vector.multi_reduction <add>, %57, %cst_38 [1] : vector<8x32xf32> to vector<8xf32>
    %59 = vector.shape_cast %58 : vector<8xf32> to vector<8x1xf32>
    %cst_39 = arith.constant 3.200000e+01 : f32
    %60 = vector.broadcast %cst_39 : f32 to vector<8x1xf32>
    %61 = arith.divf %59, %60 : vector<8x1xf32>
    %62 = vector.broadcast %54 : vector<8x1xf32> to vector<8x32xf32>
    %63 = arith.subf %48, %62 : vector<8x32xf32>
    %cst_40 = arith.constant 9.99999996E-13 : f32
    %64 = vector.broadcast %cst_40 : f32 to vector<8x1xf32>
    %65 = arith.addf %61, %64 : vector<8x1xf32>
    %66 = math.rsqrt %65 : vector<8x1xf32>
    %67 = vector.broadcast %66 : vector<8x1xf32> to vector<8x32xf32>
    %68 = arith.mulf %63, %67 : vector<8x32xf32>
    %69 = vector.broadcast %49 : vector<1x32xf32> to vector<8x32xf32>
    %70 = arith.mulf %68, %69 : vector<8x32xf32>
    %71 = vector.broadcast %50 : vector<1x32xf32> to vector<8x32xf32>
    %72 = arith.addf %70, %71 : vector<8x32xf32>
    %c0_41 = arith.constant 0 : index
    %c0_42 = arith.constant 0 : index
    %73 = vector.load %arg13[%c0_41, %c0_42] : memref<8x32xf32, #tpu.memory_space<vmem>>, vector<8x32xf32>
    tpu.vector_store %arg13[%c0_41, %c0_42], %72 {strides = array<i32>} : memref<8x32xf32, #tpu.memory_space<vmem>>, vector<8x32xf32>,
    return
  }
  func.func @transform_0(%arg0: i32) -> (i32, i32, i32) {
    %c0_i32 = arith.constant 0 : i32
    %c0_i32_0 = arith.constant 0 : i32
    %c0_i32_1 = arith.constant 0 : i32
    return %arg0, %c0_i32, %c0_i32_0 : i32, i32, i32
  }
  func.func @transform_1(%arg0: i32) -> (i32, i32, i32) {
    %c0_i32 = arith.constant 0 : i32
    %c0_i32_0 = arith.constant 0 : i32
    %c0_i32_1 = arith.constant 0 : i32
    return %arg0, %c0_i32, %c0_i32_0 : i32, i32, i32
  }
  func.func @transform_2(%arg0: i32) -> (i32, i32, i32) {
    %c0_i32 = arith.constant 0 : i32
    %c0_i32_0 = arith.constant 0 : i32
    %c0_i32_1 = arith.constant 0 : i32
    return %arg0, %c0_i32, %c0_i32_0 : i32, i32, i32
  }
  func.func @transform_3(%arg0: i32) -> (i32, i32, i32) {
    %c0_i32 = arith.constant 0 : i32
    %c0_i32_0 = arith.constant 0 : i32
    %c0_i32_1 = arith.constant 0 : i32
    %c0_i32_2 = arith.constant 0 : i32
    return %c0_i32, %c0_i32_0, %c0_i32_1 : i32, i32, i32
  }
  func.func @transform_4(%arg0: i32) -> (i32, i32) {
    %c0_i32 = arith.constant 0 : i32
    %c0_i32_0 = arith.constant 0 : i32
    %c0_i32_1 = arith.constant 0 : i32
    return %c0_i32, %c0_i32_0 : i32, i32
  }
  func.func @transform_5(%arg0: i32) -> (i32, i32) {
    %c0_i32 = arith.constant 0 : i32
    %c0_i32_0 = arith.constant 0 : i32
    %c0_i32_1 = arith.constant 0 : i32
    return %c0_i32, %c0_i32_0 : i32, i32
  }
  func.func @transform_6(%arg0: i32) -> (i32, i32) {
    %c0_i32 = arith.constant 0 : i32
    %c0_i32_0 = arith.constant 0 : i32
    %c0_i32_1 = arith.constant 0 : i32
    return %c0_i32, %c0_i32_0 : i32, i32
  }
  func.func @transform_7(%arg0: i32) -> (i32, i32) {
    %c0_i32 = arith.constant 0 : i32
    %c0_i32_0 = arith.constant 0 : i32
    %c0_i32_1 = arith.constant 0 : i32
    return %c0_i32, %c0_i32_0 : i32, i32
  }
  func.func @transform_8(%arg0: i32) -> (i32, i32) {
    %c0_i32 = arith.constant 0 : i32
    %c0_i32_0 = arith.constant 0 : i32
    %c0_i32_1 = arith.constant 0 : i32
    return %c0_i32, %c0_i32_0 : i32, i32
  }
  func.func @transform_9(%arg0: i32) -> (i32, i32) {
    %c0_i32 = arith.constant 0 : i32
    %c0_i32_0 = arith.constant 0 : i32
    %c0_i32_1 = arith.constant 0 : i32
    return %c0_i32, %c0_i32_0 : i32, i32
  }
  func.func @transform_10(%arg0: i32) -> (i32, i32) {
    %c0_i32 = arith.constant 0 : i32
    %c0_i32_0 = arith.constant 0 : i32
    %c0_i32_1 = arith.constant 0 : i32
    return %c0_i32, %c0_i32_0 : i32, i32
  }
  func.func @transform_11(%arg0: i32) -> (i32, i32) {
    %c0_i32 = arith.constant 0 : i32
    %c0_i32_0 = arith.constant 0 : i32
    %c0_i32_1 = arith.constant 0 : i32
    return %c0_i32, %c0_i32_0 : i32, i32
  }
  func.func @transform_12(%arg0: i32) -> (i32, i32) {
    %c0_i32 = arith.constant 0 : i32
    %c0_i32_0 = arith.constant 0 : i32
    return %arg0, %c0_i32 : i32, i32
  }
  func.func @transform_13(%arg0: i32) -> (i32, i32) {
    %c0_i32 = arith.constant 0 : i32
    %c0_i32_0 = arith.constant 0 : i32
    return %arg0, %c0_i32 : i32, i32
  }
}

</mosaic_0001>

<llo_original>
// kernel: tpu_custom_call.1
$region0: #{tpu_custom_call.1}
  #allocation0 [shape = 'u32[]', space=smem, size = 0x4, offset = 0x4, fixed_abs, tag = 'smem constant byte address 0x4 - core index']
  #allocation1 [shape = 'u32[144,128]{1,0:T(1,128)}', space=vmem, size = 0x12000, scoped, tag = 'internal scratch']
  %s0 = inlined_call_operand.hbm [shape: f32[2,8,32], index: 0, kind: input, shape index: {}]
  %s1 = inlined_call_operand.hbm [shape: f32[2,16,32], index: 1, kind: input, shape index: {}]
  %s2 = inlined_call_operand.hbm [shape: f32[2,1,16], index: 2, kind: input, shape index: {}]
  %s3 = inlined_call_operand.vmem [shape: f32[4,1,32], index: 3, kind: input, shape index: {}]
  %s4 = inlined_call_operand.hbm [shape: f32[32,32], index: 4, kind: input, shape index: {}]
  %s5 = inlined_call_operand.vmem [shape: f32[1,32], index: 5, kind: input, shape index: {}]
  %s6 = inlined_call_operand.hbm [shape: f32[32,64], index: 6, kind: input, shape index: {}]
  %s7 = inlined_call_operand.vmem [shape: f32[1,64], index: 7, kind: input, shape index: {}]
  %s8 = inlined_call_operand.hbm [shape: f32[32,32], index: 8, kind: input, shape index: {}]
  %s9 = inlined_call_operand.vmem [shape: f32[1,32], index: 9, kind: input, shape index: {}]
  %s10 = inlined_call_operand.vmem [shape: f32[1,32], index: 10, kind: input, shape index: {}]
  %s11 = inlined_call_operand.vmem [shape: f32[1,32], index: 11, kind: input, shape index: {}]
  %s12 = inlined_call_operand.hbm [shape: f32[16,32], index: 12, kind: output, shape index: {0}]
  %s13 = inlined_call_operand.vmem [shape: f32[64,16], index: 13, kind: output, shape index: {1}]
  %14 = xla_tuple %s12, %s13
  %s15 = sld [smem:[#allocation0]]
  $region113: #{tpu_custom_call.1} parent=0
    _
  %s17 = ssub.s32 1, %s15
  %s18 = scalar_select 0, %s17, %s15
  $region1: #{tpu_custom_call.1} parent=0
    #allocation2 [shape = 'u8[8192]{0}', space=vmem, size = 0x2000, scoped, tag = 'input window, operand 0']
    #allocation3 [shape = 's32[2]{0}', space=sflag, size = 0x8, scoped, tag = 'scoped memory for tpu_custom_call.1']
    #allocation4 [shape = 's32[2]{0}', space=sflag, size = 0x8, scoped, tag = 'scoped memory for tpu_custom_call.1']
    #allocation5 [shape = 'u8[16384]{0}', space=vmem, size = 0x4000, scoped, tag = 'input window, operand 1']
    #allocation6 [shape = 's32[2]{0}', space=sflag, size = 0x8, scoped, tag = 'scoped memory for tpu_custom_call.1']
    #allocation7 [shape = 'u8[1024]{0}', space=vmem, size = 0x400, scoped, tag = 'input window, operand 2']
    #allocation8 [shape = 'u8[16384]{0}', space=vmem, size = 0x4000, scoped, tag = 'input window, operand 4, single buffered']
    #allocation9 [shape = 's32[1]{0}', space=sflag, size = 0x4, scoped, tag = 'scoped memory for tpu_custom_call.1']
    #allocation10 [shape = 'u8[16384]{0}', space=vmem, size = 0x4000, scoped, tag = 'input window, operand 6, single buffered']
    #allocation11 [shape = 'u8[16384]{0}', space=vmem, size = 0x4000, scoped, tag = 'input window, operand 8, single buffered']
    #allocation12 [shape = 's32[1]{0}', space=sflag, size = 0x4, scoped, tag = 'scoped memory for tpu_custom_call.1']
    #allocation13 [shape = 'u8[8192]{0}', space=vmem, size = 0x2000, scoped, tag = 'output window, operand 0']
    %19 = vsyncpa [#allocation3], 0
    %s20 = scalar_lea.sflag [#allocation3], 1
    %21 = vsyncpa %s20, 0
    %22 = vsyncpa [#allocation6], 0
    %s23 = scalar_lea.sflag [#allocation6], 1
    %24 = vsyncpa %s23, 0
    %25 = vsyncpa [#allocation9], 0
    %26 = vsyncpa [#allocation12], 0
    %27 = vsyncpa [#allocation4], 0
    %s28 = scalar_lea.sflag [#allocation4], 1
    %29 = vsyncpa %s28, 0
    loop: start=0, step=1, limit=4
    $region2: #{tpu_custom_call.1} parent=1 // loop_pre_header
      _
    $region3: #{tpu_custom_call.1} parent=1 // loop_header
      %s31 = sphi 0, %s35
      %p32 = scmp.ge.s32.totalorder %s31, 4
      %s41 = sphi 0, %s43
      %s44 = sphi 0, %s41
      %s45 = sphi 0, %s44
      %s61 = sphi 0, %s45
      %s67 = sphi 0, %s69
      %s70 = sphi 0, %s67
      %s71 = sphi 0, %s70
      %s87 = sphi 0, %s71
      %s93 = sphi 0, %s95
      %s96 = sphi 0, %s93
      %s97 = sphi 0, %s96
      %s113 = sphi 0, %s97
      %s117 = sphi 0, %s117
      %s119 = sphi 0, %s117
      %s120 = sphi 0, %s119
      %s134 = sphi 0, %s120
      %s138 = sphi 0, %s138
      %s140 = sphi 0, %s138
      %s141 = sphi 0, %s140
      %s155 = sphi 0, %s141
      %s159 = sphi 0, %s159
      %s161 = sphi 0, %s159
      %s162 = sphi 0, %s161
      %s176 = sphi 0, %s162
      %s180 = sphi 0, %s180
      %s182 = sphi 0, %s180
      %s183 = sphi 0, %s182
      %s197 = sphi 0, %s183
      %s201 = sphi 0, %s201
      %s203 = sphi 0, %s201
      %s204 = sphi 0, %s203
      %s218 = sphi 0, %s204
      %s222 = sphi 0, %s222
      %s224 = sphi 0, %s222
      %s225 = sphi 0, %s224
      %s239 = sphi 0, %s225
      %s243 = sphi 0, %s243
      %s245 = sphi 0, %s243
      %s246 = sphi 0, %s245
      %s260 = sphi 0, %s246
      %s264 = sphi 0, %s264
      %s266 = sphi 0, %s264
      %s267 = sphi 0, %s266
      %s281 = sphi 0, %s267
      %s285 = sphi 0, %s285
      %s287 = sphi 0, %s285
      %s288 = sphi 0, %s287
      %s302 = sphi 0, %s288
      %s308 = sphi 0, %s310
      %s311 = sphi 0, %s308
      %s312 = sphi 0, %s311
      %s328 = sphi 0, %s312
      %s334 = sphi 0, %s336
      %s337 = sphi 0, %s334
      %s338 = sphi 0, %s337
      %s354 = sphi 0, %s338
    $region4: #{tpu_custom_call.1} parent=1 // loop_header_branch
      %34 = sbr.rel (%p32) target = $region8
    $region5: #{tpu_custom_call.1} parent=1 // loop_body
      %s36 = ssub.s32 %s31, 1
      %s37 = ssub.s32 %s31, 2
      %s38 = sadd.s32 %s31, 1
      %s39 = ssub.s32 %s31, %s38
      %p40 = scmp.eq.s32.totalorder %s39, 0
      %s42 = sadd.s32 %s41, 1
      %s43 = scalar_select %p40, %s41, %s42
      %p46 = pneg %p40
      %p47 = scmp.eq.s32.totalorder %s31, 1
      %p48 = por %p46, %p47
      %p49 = scmp.ne.s32.totalorder %s41, %s44
      %p50 = scmp.eq.s32.totalorder %s31, 0
      %p51 = por %p49, %p50
      %p52 = scmp.ne.s32.totalorder %s41, %s44
      %p53 = scmp.eq.s32.totalorder %s36, 1
      %p54 = por %p52, %p53
      %p55 = scmp.ne.s32.totalorder %s44, %s45
      %p56 = scmp.eq.s32.totalorder %s36, 0
      %p57 = por %p55, %p56
      %p58 = scmp.ne.s32.totalorder %s44, %s45
      %p59 = scmp.eq.s32.totalorder %s37, 1
      %p60 = por %p58, %p59
      %p62 = scmp.ne.s32.totalorder %s45, %s61
      %p63 = scmp.eq.s32.totalorder %s37, 0
      %p64 = por %p62, %p63
      %s65 = ssub.s32 %s31, %s38
      %p66 = scmp.eq.s32.totalorder %s65, 0
      %s68 = sadd.s32 %s67, 1
      %s69 = scalar_select %p66, %s67, %s68
      %p72 = pneg %p66
      %p73 = scmp.eq.s32.totalorder %s31, 1
      %p74 = por %p72, %p73
      %p75 = scmp.ne.s32.totalorder %s67, %s70
      %p76 = scmp.eq.s32.totalorder %s31, 0
      %p77 = por %p75, %p76
      %p78 = scmp.ne.s32.totalorder %s67, %s70
      %p79 = scmp.eq.s32.totalorder %s36, 1
      %p80 = por %p78, %p79
      %p81 = scmp.ne.s32.totalorder %s70, %s71
      %p82 = scmp.eq.s32.totalorder %s36, 0
      %p83 = por %p81, %p82
      %p84 = scmp.ne.s32.totalorder %s70, %s71
      %p85 = scmp.eq.s32.totalorder %s37, 1
      %p86 = por %p84, %p85
      %p88 = scmp.ne.s32.totalorder %s71, %s87
      %p89 = scmp.eq.s32.totalorder %s37, 0
      %p90 = por %p88, %p89
      %s91 = ssub.s32 %s31, %s38
      %p92 = scmp.eq.s32.totalorder %s91, 0
      %s94 = sadd.s32 %s93, 1
      %s95 = scalar_select %p92, %s93, %s94
      %p98 = pneg %p92
      %p99 = scmp.eq.s32.totalorder %s31, 1
      %p100 = por %p98, %p99
      %p101 = scmp.ne.s32.totalorder %s93, %s96
      %p102 = scmp.eq.s32.totalorder %s31, 0
      %p103 = por %p101, %p102
      %p104 = scmp.ne.s32.totalorder %s93, %s96
      %p105 = scmp.eq.s32.totalorder %s36, 1
      %p106 = por %p104, %p105
      %p107 = scmp.ne.s32.totalorder %s96, %s97
      %p108 = scmp.eq.s32.totalorder %s36, 0
      %p109 = por %p107, %p108
      %p110 = scmp.ne.s32.totalorder %s96, %s97
      %p111 = scmp.eq.s32.totalorder %s37, 1
      %p112 = por %p110, %p111
      %p114 = scmp.ne.s32.totalorder %s97, %s113
      %p115 = scmp.eq.s32.totalorder %s37, 0
      %p116 = por %p114, %p115
      %s118 = sadd.s32 %s117, 1
      %p121 = scmp.eq.s32.totalorder %s31, 1
      %p122 = scmp.ne.s32.totalorder %s117, %s119
      %p123 = scmp.eq.s32.totalorder %s31, 0
      %p124 = por %p122, %p123
      %p125 = scmp.ne.s32.totalorder %s117, %s119
      %p126 = scmp.eq.s32.totalorder %s36, 1
      %p127 = por %p125, %p126
      %p128 = scmp.ne.s32.totalorder %s119, %s120
      %p129 = scmp.eq.s32.totalorder %s36, 0
      %p130 = por %p128, %p129
      %p131 = scmp.ne.s32.totalorder %s119, %s120
      %p132 = scmp.eq.s32.totalorder %s37, 1
      %p133 = por %p131, %p132
      %p135 = scmp.ne.s32.totalorder %s120, %s134
      %p136 = scmp.eq.s32.totalorder %s37, 0
      %p137 = por %p135, %p136
      %s139 = sadd.s32 %s138, 1
      %p142 = scmp.eq.s32.totalorder %s31, 1
      %p143 = scmp.ne.s32.totalorder %s138, %s140
      %p144 = scmp.eq.s32.totalorder %s31, 0
      %p145 = por %p143, %p144
      %p146 = scmp.ne.s32.totalorder %s138, %s140
      %p147 = scmp.eq.s32.totalorder %s36, 1
      %p148 = por %p146, %p147
      %p149 = scmp.ne.s32.totalorder %s140, %s141
      %p150 = scmp.eq.s32.totalorder %s36, 0
      %p151 = por %p149, %p150
      %p152 = scmp.ne.s32.totalorder %s140, %s141
      %p153 = scmp.eq.s32.totalorder %s37, 1
      %p154 = por %p152, %p153
      %p156 = scmp.ne.s32.totalorder %s141, %s155
      %p157 = scmp.eq.s32.totalorder %s37, 0
      %p158 = por %p156, %p157
      %s160 = sadd.s32 %s159, 1
      %p163 = scmp.eq.s32.totalorder %s31, 1
      %p164 = scmp.ne.s32.totalorder %s159, %s161
      %p165 = scmp.eq.s32.totalorder %s31, 0
      %p166 = por %p164, %p165
      %p167 = scmp.ne.s32.totalorder %s159, %s161
      %p168 = scmp.eq.s32.totalorder %s36, 1
      %p169 = por %p167, %p168
      %p170 = scmp.ne.s32.totalorder %s161, %s162
      %p171 = scmp.eq.s32.totalorder %s36, 0
      %p172 = por %p170, %p171
      %p173 = scmp.ne.s32.totalorder %s161, %s162
      %p174 = scmp.eq.s32.totalorder %s37, 1
      %p175 = por %p173, %p174
      %p177 = scmp.ne.s32.totalorder %s162, %s176
      %p178 = scmp.eq.s32.totalorder %s37, 0
      %p179 = por %p177, %p178
      %s181 = sadd.s32 %s180, 1
      %p184 = scmp.eq.s32.totalorder %s31, 1
      %p185 = scmp.ne.s32.totalorder %s180, %s182
      %p186 = scmp.eq.s32.totalorder %s31, 0
      %p187 = por %p185, %p186
      %p188 = scmp.ne.s32.totalorder %s180, %s182
      %p189 = scmp.eq.s32.totalorder %s36, 1
      %p190 = por %p188, %p189
      %p191 = scmp.ne.s32.totalorder %s182, %s183
      %p192 = scmp.eq.s32.totalorder %s36, 0
      %p193 = por %p191, %p192
      %p194 = scmp.ne.s32.totalorder %s182, %s183
      %p195 = scmp.eq.s32.totalorder %s37, 1
      %p196 = por %p194, %p195
      %p198 = scmp.ne.s32.totalorder %s183, %s197
      %p199 = scmp.eq.s32.totalorder %s37, 0
      %p200 = por %p198, %p199
      %s202 = sadd.s32 %s201, 1
      %p205 = scmp.eq.s32.totalorder %s31, 1
      %p206 = scmp.ne.s32.totalorder %s201, %s203
      %p207 = scmp.eq.s32.totalorder %s31, 0
      %p208 = por %p206, %p207
      %p209 = scmp.ne.s32.totalorder %s201, %s203
      %p210 = scmp.eq.s32.totalorder %s36, 1
      %p211 = por %p209, %p210
      %p212 = scmp.ne.s32.totalorder %s203, %s204
      %p213 = scmp.eq.s32.totalorder %s36, 0
      %p214 = por %p212, %p213
      %p215 = scmp.ne.s32.totalorder %s203, %s204
      %p216 = scmp.eq.s32.totalorder %s37, 1
      %p217 = por %p215, %p216
      %p219 = scmp.ne.s32.totalorder %s204, %s218
      %p220 = scmp.eq.s32.totalorder %s37, 0
      %p221 = por %p219, %p220
      %s223 = sadd.s32 %s222, 1
      %p226 = scmp.eq.s32.totalorder %s31, 1
      %p227 = scmp.ne.s32.totalorder %s222, %s224
      %p228 = scmp.eq.s32.totalorder %s31, 0
      %p229 = por %p227, %p228
      %p230 = scmp.ne.s32.totalorder %s222, %s224
      %p231 = scmp.eq.s32.totalorder %s36, 1
      %p232 = por %p230, %p231
      %p233 = scmp.ne.s32.totalorder %s224, %s225
      %p234 = scmp.eq.s32.totalorder %s36, 0
      %p235 = por %p233, %p234
      %p236 = scmp.ne.s32.totalorder %s224, %s225
      %p237 = scmp.eq.s32.totalorder %s37, 1
      %p238 = por %p236, %p237
      %p240 = scmp.ne.s32.totalorder %s225, %s239
      %p241 = scmp.eq.s32.totalorder %s37, 0
      %p242 = por %p240, %p241
      %s244 = sadd.s32 %s243, 1
      %p247 = scmp.eq.s32.totalorder %s31, 1
      %p248 = scmp.ne.s32.totalorder %s243, %s245
      %p249 = scmp.eq.s32.totalorder %s31, 0
      %p250 = por %p248, %p249
      %p251 = scmp.ne.s32.totalorder %s243, %s245
      %p252 = scmp.eq.s32.totalorder %s36, 1
      %p253 = por %p251, %p252
      %p254 = scmp.ne.s32.totalorder %s245, %s246
      %p255 = scmp.eq.s32.totalorder %s36, 0
      %p256 = por %p254, %p255
      %p257 = scmp.ne.s32.totalorder %s245, %s246
      %p258 = scmp.eq.s32.totalorder %s37, 1
      %p259 = por %p257, %p258
      %p261 = scmp.ne.s32.totalorder %s246, %s260
      %p262 = scmp.eq.s32.totalorder %s37, 0
      %p263 = por %p261, %p262
      %s265 = sadd.s32 %s264, 1
      %p268 = scmp.eq.s32.totalorder %s31, 1
      %p269 = scmp.ne.s32.totalorder %s264, %s266
      %p270 = scmp.eq.s32.totalorder %s31, 0
      %p271 = por %p269, %p270
      %p272 = scmp.ne.s32.totalorder %s264, %s266
      %p273 = scmp.eq.s32.totalorder %s36, 1
      %p274 = por %p272, %p273
      %p275 = scmp.ne.s32.totalorder %s266, %s267
      %p276 = scmp.eq.s32.totalorder %s36, 0
      %p277 = por %p275, %p276
      %p278 = scmp.ne.s32.totalorder %s266, %s267
      %p279 = scmp.eq.s32.totalorder %s37, 1
      %p280 = por %p278, %p279
      %p282 = scmp.ne.s32.totalorder %s267, %s281
      %p283 = scmp.eq.s32.totalorder %s37, 0
      %p284 = por %p282, %p283
      %s286 = sadd.s32 %s285, 1
      %p289 = scmp.eq.s32.totalorder %s31, 1
      %p290 = scmp.ne.s32.totalorder %s285, %s287
      %p291 = scmp.eq.s32.totalorder %s31, 0
      %p292 = por %p290, %p291
      %p293 = scmp.ne.s32.totalorder %s285, %s287
      %p294 = scmp.eq.s32.totalorder %s36, 1
      %p295 = por %p293, %p294
      %p296 = scmp.ne.s32.totalorder %s287, %s288
      %p297 = scmp.eq.s32.totalorder %s36, 0
      %p298 = por %p296, %p297
      %p299 = scmp.ne.s32.totalorder %s287, %s288
      %p300 = scmp.eq.s32.totalorder %s37, 1
      %p301 = por %p299, %p300
      %p303 = scmp.ne.s32.totalorder %s288, %s302
      %p304 = scmp.eq.s32.totalorder %s37, 0
      %p305 = por %p303, %p304
      %s306 = ssub.s32 %s31, %s38
      %p307 = scmp.eq.s32.totalorder %s306, 0
      %s309 = sadd.s32 %s308, 1
      %s310 = scalar_select %p307, %s308, %s309
      %p313 = pneg %p307
      %p314 = scmp.eq.s32.totalorder %s31, 1
      %p315 = por %p313, %p314
      %p316 = scmp.ne.s32.totalorder %s308, %s311
      %p317 = scmp.eq.s32.totalorder %s31, 0
      %p318 = por %p316, %p317
      %p319 = scmp.ne.s32.totalorder %s308, %s311
      %p320 = scmp.eq.s32.totalorder %s36, 1
      %p321 = por %p319, %p320
      %p322 = scmp.ne.s32.totalorder %s311, %s312
      %p323 = scmp.eq.s32.totalorder %s36, 0
      %p324 = por %p322, %p323
      %p325 = scmp.ne.s32.totalorder %s311, %s312
      %p326 = scmp.eq.s32.totalorder %s37, 1
      %p327 = por %p325, %p326
      %p329 = scmp.ne.s32.totalorder %s312, %s328
      %p330 = scmp.eq.s32.totalorder %s37, 0
      %p331 = por %p329, %p330
      %s332 = ssub.s32 %s31, %s38
      %p333 = scmp.eq.s32.totalorder %s332, 0
      %s335 = sadd.s32 %s334, 1
      %s336 = scalar_select %p333, %s334, %s335
      %p339 = pneg %p333
      %p340 = scmp.eq.s32.totalorder %s31, 1
      %p341 = por %p339, %p340
      %p342 = scmp.ne.s32.totalorder %s334, %s337
      %p343 = scmp.eq.s32.totalorder %s31, 0
      %p344 = por %p342, %p343
      %p345 = scmp.ne.s32.totalorder %s334, %s337
      %p346 = scmp.eq.s32.totalorder %s36, 1
      %p347 = por %p345, %p346
      %p348 = scmp.ne.s32.totalorder %s337, %s338
      %p349 = scmp.eq.s32.totalorder %s36, 0
      %p350 = por %p348, %p349
      %p351 = scmp.ne.s32.totalorder %s337, %s338
      %p352 = scmp.eq.s32.totalorder %s37, 1
      %p353 = por %p351, %p352
      %p355 = scmp.ne.s32.totalorder %s338, %s354
      %p356 = scmp.eq.s32.totalorder %s37, 0
      %p357 = por %p355, %p356
      %p358 = scmp.le.s32.totalorder 1, %s31
      %p359 = scmp.lt.s32.totalorder %s31, 3
      %p360 = pnand %p358, %p359
      %p361 = pneg %p360
      // Predicated region
      $region9: #{tpu_custom_call.1} parent=5 // pred_check
        _
      $region10: #{tpu_custom_call.1} parent=5 // pred_check_branch
        %363 = sbr.rel (%p360) target = $region12
      $region11: #{tpu_custom_call.1} parent=5 // pred_region
        %s364 = ssub.s32 %s31, 1
        // Predicated region
        $region13: #{tpu_custom_call.1} parent=11 // pred_check
          %p365 = pneg %p130
        $region14: #{tpu_custom_call.1} parent=11 // pred_check_branch
          %367 = sbr.rel (%p365) target = $region16
        $region15: #{tpu_custom_call.1} parent=11 // pred_region
          _
        $region16: #{tpu_custom_call.1} parent=11 // pred_fallthru
          _
        // Predicated region
        $region17: #{tpu_custom_call.1} parent=11 // pred_check
          %p368 = pneg %p151
        $region18: #{tpu_custom_call.1} parent=11 // pred_check_branch
          %370 = sbr.rel (%p368) target = $region20
        $region19: #{tpu_custom_call.1} parent=11 // pred_region
          %s372 = ssub.s32 512, 512
          %373 = vsyncadd [#allocation9], %s372
          %s374 = sshll.u32 [#allocation8], 4
          %s375 = int_to_ptr.vmem [resolvable:$true] %s374
          %380 = dma.hbm_to_vmem [thread:$0]  %s4, 512, %s375, [#allocation9], 128, 128, 8
        $region20: #{tpu_custom_call.1} parent=11 // pred_fallthru
          _
        // Predicated region
        $region21: #{tpu_custom_call.1} parent=11 // pred_check
          %p381 = pneg %p172
        $region22: #{tpu_custom_call.1} parent=11 // pred_check_branch
          %383 = sbr.rel (%p381) target = $region24
        $region23: #{tpu_custom_call.1} parent=11 // pred_region
          _
        $region24: #{tpu_custom_call.1} parent=11 // pred_fallthru
          _
        // Predicated region
        $region25: #{tpu_custom_call.1} parent=11 // pred_check
          %p384 = pneg %p193
        $region26: #{tpu_custom_call.1} parent=11 // pred_check_branch
          %386 = sbr.rel (%p384) target = $region28
        $region27: #{tpu_custom_call.1} parent=11 // pred_region
          %s388 = ssub.s32 512, 512
          %389 = vsyncadd [#allocation9], %s388
          %s390 = sshll.u32 [#allocation10], 4
          %s391 = int_to_ptr.vmem [resolvable:$true] %s390
          %396 = dma.hbm_to_vmem [thread:$0]  %s6, 512, %s391, [#allocation9], 128, 128, 8
        $region28: #{tpu_custom_call.1} parent=11 // pred_fallthru
          _
        // Predicated region
        $region29: #{tpu_custom_call.1} parent=11 // pred_check
          %p397 = pneg %p214
        $region30: #{tpu_custom_call.1} parent=11 // pred_check_branch
          %399 = sbr.rel (%p397) target = $region32
        $region31: #{tpu_custom_call.1} parent=11 // pred_region
          _
        $region32: #{tpu_custom_call.1} parent=11 // pred_fallthru
          _
        // Predicated region
        $region33: #{tpu_custom_call.1} parent=11 // pred_check
          %p400 = pneg %p235
        $region34: #{tpu_custom_call.1} parent=11 // pred_check_branch
          %402 = sbr.rel (%p400) target = $region36
        $region35: #{tpu_custom_call.1} parent=11 // pred_region
          %s404 = ssub.s32 512, 512
          %405 = vsyncadd [#allocation12], %s404
          %s406 = sshll.u32 [#allocation11], 4
          %s407 = int_to_ptr.vmem [resolvable:$true] %s406
          %412 = dma.hbm_to_vmem [thread:$0]  %s8, 512, %s407, [#allocation12], 128, 128, 8
        $region36: #{tpu_custom_call.1} parent=11 // pred_fallthru
          _
        // Predicated region
        $region37: #{tpu_custom_call.1} parent=11 // pred_check
          %p413 = pneg %p256
        $region38: #{tpu_custom_call.1} parent=11 // pred_check_branch
          %415 = sbr.rel (%p413) target = $region40
        $region39: #{tpu_custom_call.1} parent=11 // pred_region
          _
        $region40: #{tpu_custom_call.1} parent=11 // pred_fallthru
          _
        // Predicated region
        $region41: #{tpu_custom_call.1} parent=11 // pred_check
          %p416 = pneg %p277
        $region42: #{tpu_custom_call.1} parent=11 // pred_check_branch
          %418 = sbr.rel (%p416) target = $region44
        $region43: #{tpu_custom_call.1} parent=11 // pred_region
          _
        $region44: #{tpu_custom_call.1} parent=11 // pred_fallthru
          _
        // Predicated region
        $region45: #{tpu_custom_call.1} parent=11 // pred_check
          %p419 = pneg %p298
        $region46: #{tpu_custom_call.1} parent=11 // pred_check_branch
          %421 = sbr.rel (%p419) target = $region48
        $region47: #{tpu_custom_call.1} parent=11 // pred_region
          _
        $region48: #{tpu_custom_call.1} parent=11 // pred_fallthru
          _
      $region12: #{tpu_custom_call.1} parent=5 // pred_fallthru
        _
      %p422 = scmp.lt.s32.totalorder %s31, 2
      // Predicated region
      $region49: #{tpu_custom_call.1} parent=5 // pred_check
        %p423 = pneg %p422
      $region50: #{tpu_custom_call.1} parent=5 // pred_check_branch
        %425 = sbr.rel (%p423) target = $region52
      $region51: #{tpu_custom_call.1} parent=5 // pred_region
        // Predicated region
        $region53: #{tpu_custom_call.1} parent=51 // pred_check
          %p426 = pneg %p51
        $region54: #{tpu_custom_call.1} parent=51 // pred_check_branch
          %428 = sbr.rel (%p426) target = $region56
        $region55: #{tpu_custom_call.1} parent=51 // pred_region
          %s429 = sand.u32 %s41, 1
          %s430 = scalar_lea.sflag [#allocation3], %s429
          %s431 = sand.u32 %s41, 1
          %s432 = smul.addr %s431, 8
          %s433 = scalar_lea.vmem [#allocation2], %s432
          %s435 = ssub.s32 128, 128
          %436 = vsyncadd %s430, %s435
          %s437 = smul.addr %s31, 128
          %s438 = scalar_lea.hbm %s0, %s437
          %s440 = sshll.u32 %s433, 4
          %s441 = int_to_ptr.vmem [resolvable:$true] %s440
          %443 = dma.hbm_to_vmem [thread:$0]  %s438, 128, %s441, %s430
        $region56: #{tpu_custom_call.1} parent=51 // pred_fallthru
          _
        // Predicated region
        $region57: #{tpu_custom_call.1} parent=51 // pred_check
          %p444 = pneg %p77
        $region58: #{tpu_custom_call.1} parent=51 // pred_check_branch
          %446 = sbr.rel (%p444) target = $region60
        $region59: #{tpu_custom_call.1} parent=51 // pred_region
          %s447 = sand.u32 %s31, 1
          %s448 = scalar_lea.sflag [#allocation6], %s447
          %s449 = sand.u32 %s67, 1
          %s450 = smul.addr %s449, 16
          %s451 = scalar_lea.vmem [#allocation5], %s450
          %s453 = ssub.s32 256, 256
          %454 = vsyncadd %s448, %s453
          %s455 = smul.addr %s31, 2
          %s456 = smul.addr %s455, 128
          %s457 = scalar_lea.hbm %s1, %s456
          %s458 = sshll.u32 %s451, 4
          %s459 = int_to_ptr.vmem [resolvable:$true] %s458
          %464 = dma.hbm_to_vmem [thread:$0]  %s457, 256, %s459, %s448, 128, 128, 8
        $region60: #{tpu_custom_call.1} parent=51 // pred_fallthru
          _
        // Predicated region
        $region61: #{tpu_custom_call.1} parent=51 // pred_check
          %p465 = pneg %p103
        $region62: #{tpu_custom_call.1} parent=51 // pred_check_branch
          %467 = sbr.rel (%p465) target = $region64
        $region63: #{tpu_custom_call.1} parent=51 // pred_region
          %s468 = sand.u32 %s31, 1
          %s469 = scalar_lea.sflag [#allocation6], %s468
          %s470 = sand.u32 %s93, 1
          %s471 = scalar_lea.vmem [#allocation7], %s470
          %s473 = ssub.s32 16, 16
          %474 = vsyncadd %s469, %s473
          %s475 = smul.addr %s31, 16
          %s476 = scalar_lea.hbm %s2, %s475
          %s478 = sshll.u32 %s471, 4
          %s479 = int_to_ptr.vmem [resolvable:$true] %s478
          %481 = dma.hbm_to_vmem [thread:$0]  %s476, 16, %s479, %s469
        $region64: #{tpu_custom_call.1} parent=51 // pred_fallthru
          _
      $region52: #{tpu_custom_call.1} parent=5 // pred_fallthru
        _
      %p482 = scmp.le.s32.totalorder 1, %s31
      %p483 = scmp.lt.s32.totalorder %s31, 3
      %p484 = pnand %p482, %p483
      %p485 = pneg %p484
      // Predicated region
      $region65: #{tpu_custom_call.1} parent=5 // pred_check
        _
      $region66: #{tpu_custom_call.1} parent=5 // pred_check_branch
        %487 = sbr.rel (%p484) target = $region68
      $region67: #{tpu_custom_call.1} parent=5 // pred_region
        %s488 = ssub.s32 %s31, 1
        %s489 = sand.u32 %s44, 1
        %s490 = scalar_lea.sflag [#allocation3], %s489
        %s491 = sand.u32 %s44, 1
        %s492 = smul.addr %s491, 8
        %s493 = scalar_lea.vmem [#allocation2], %s492
        // Predicated region
        $region69: #{tpu_custom_call.1} parent=67 // pred_check
          %p494 = pneg %p57
        $region70: #{tpu_custom_call.1} parent=67 // pred_check_branch
          %496 = sbr.rel (%p494) target = $region72
        $region71: #{tpu_custom_call.1} parent=67 // pred_region
          %497 = dma.done %s490, 128
        $region72: #{tpu_custom_call.1} parent=67 // pred_fallthru
          _
        %s498 = sand.u32 %s36, 1
        %s499 = scalar_lea.sflag [#allocation6], %s498
        %s500 = sand.u32 %s70, 1
        %s501 = smul.addr %s500, 16
        %s502 = scalar_lea.vmem [#allocation5], %s501
        // Predicated region
        $region73: #{tpu_custom_call.1} parent=67 // pred_check
          %p503 = pneg %p83
        $region74: #{tpu_custom_call.1} parent=67 // pred_check_branch
          %505 = sbr.rel (%p503) target = $region76
        $region75: #{tpu_custom_call.1} parent=67 // pred_region
          %506 = dma.done %s499, 256
        $region76: #{tpu_custom_call.1} parent=67 // pred_fallthru
          _
        %s507 = sand.u32 %s36, 1
        %s508 = scalar_lea.sflag [#allocation6], %s507
        %s509 = sand.u32 %s96, 1
        %s510 = scalar_lea.vmem [#allocation7], %s509
        // Predicated region
        $region77: #{tpu_custom_call.1} parent=67 // pred_check
          %p511 = pneg %p109
        $region78: #{tpu_custom_call.1} parent=67 // pred_check_branch
          %513 = sbr.rel (%p511) target = $region80
        $region79: #{tpu_custom_call.1} parent=67 // pred_region
          %514 = dma.done %s508, 16
        $region80: #{tpu_custom_call.1} parent=67 // pred_fallthru
          _
        // Predicated region
        $region81: #{tpu_custom_call.1} parent=67 // pred_check
          %p515 = pneg %p151
        $region82: #{tpu_custom_call.1} parent=67 // pred_check_branch
          %517 = sbr.rel (%p515) target = $region84
        $region83: #{tpu_custom_call.1} parent=67 // pred_region
          %518 = dma.done [#allocation9], 512
        $region84: #{tpu_custom_call.1} parent=67 // pred_fallthru
          _
        // Predicated region
        $region85: #{tpu_custom_call.1} parent=67 // pred_check
          %p519 = pneg %p193
        $region86: #{tpu_custom_call.1} parent=67 // pred_check_branch
          %521 = sbr.rel (%p519) target = $region88
        $region87: #{tpu_custom_call.1} parent=67 // pred_region
          %522 = dma.done [#allocation9], 512
        $region88: #{tpu_custom_call.1} parent=67 // pred_fallthru
          _
        // Predicated region
        $region89: #{tpu_custom_call.1} parent=67 // pred_check
          %p523 = pneg %p235
        $region90: #{tpu_custom_call.1} parent=67 // pred_check_branch
          %525 = sbr.rel (%p523) target = $region92
        $region91: #{tpu_custom_call.1} parent=67 // pred_region
          %526 = dma.done [#allocation12], 512
        $region92: #{tpu_custom_call.1} parent=67 // pred_fallthru
          _
        %s527 = sand.u32 %s44, 1
        %s528 = scalar_lea.sflag [#allocation3], %s527
        %s529 = sand.u32 %s44, 1
        %s530 = smul.addr %s529, 8
        %s531 = scalar_lea.vmem [#allocation2], %s530
        %p532 = pneg %p57
        %p533 = pneg %p54
        %s534 = sand.u32 %s36, 1
        %s535 = scalar_lea.sflag [#allocation6], %s534
        %s536 = sand.u32 %s70, 1
        %s537 = smul.addr %s536, 16
        %s538 = scalar_lea.vmem [#allocation5], %s537
        %p539 = pneg %p83
        %p540 = pneg %p80
        %s541 = sand.u32 %s36, 1
        %s542 = scalar_lea.sflag [#allocation6], %s541
        %s543 = sand.u32 %s96, 1
        %s544 = scalar_lea.vmem [#allocation7], %s543
        %p545 = pneg %p109
        %p546 = pneg %p106
        %p547 = pneg %p130
        %p548 = pneg %p127
        %p549 = pneg %p151
        %p550 = pneg %p148
        %p551 = pneg %p172
        %p552 = pneg %p169
        %p553 = pneg %p193
        %p554 = pneg %p190
        %p555 = pneg %p214
        %p556 = pneg %p211
        %p557 = pneg %p235
        %p558 = pneg %p232
        %p559 = pneg %p256
        %p560 = pneg %p253
        %p561 = pneg %p277
        %p562 = pneg %p274
        %p563 = pneg %p298
        %p564 = pneg %p295
        %p565 = pneg %p324
        %p566 = pneg %p321
        %s567 = sand.u32 %s311, 1
        %s568 = scalar_lea.sflag [#allocation4], %s567
        %s569 = sand.u32 %s311, 1
        %s570 = smul.addr %s569, 8
        %s571 = scalar_lea.vmem [#allocation13], %s570
        %p572 = pneg %p350
        %p573 = pneg %p347
        %s574 = smul.u32 4, %s36
        %p575 = scmp.lt.s32.totalorder %s574, 7
        %s576 = scalar_select %p575, %s574, 7
        %s577 = smul.addr %s576, 8
        %s578 = scalar_lea.vmem %s13, %s577
        %s579 = smul.u32 4, %s36
        %p580 = scmp.lt.s32.totalorder %s579, 7
        %s581 = scalar_select %p580, %s579, 7
        %s582 = smul.addr %s581, 8
        %s583 = scalar_lea.vmem %s13, %s582
        %s584 = smul.u32 4, %s36
        %v585 = vld [vmem:[%s493] sm:$0xff]
        %v586 = vld [vmem:[%s502] sm:$0xff]
        %v587 = vld [vmem:[%s502 + $0x8] sm:$0xff]
        %v588 = vld [vmem:[%s510] sm:$0x1]
        %v589 = vld [vmem:[%s3] sm:$0x1]
        %v590 = vld [vmem:[%s3 + $0x1] sm:$0x1]
        %v591 = vld [vmem:[%s3 + $0x2] sm:$0x1]
        %v592 = vld [vmem:[%s3 + $0x3] sm:$0x1]
        %v593 = vld [vmem:[#allocation8] sm:$0xff]
        %v594 = vld [vmem:[#allocation8 + $0x8] sm:$0xff]
        %v595 = vld [vmem:[#allocation8 + $0x10] sm:$0xff]
        %v596 = vld [vmem:[#allocation8 + $0x18] sm:$0xff]
        %v597 = vld [vmem:[%s5] sm:$0x1]
        %v599 = vlaneseq
        %v600 = vshrl.u32 %v599, 7
        %v601 = vsub.s32 0, %v600
        %v602 = vrot.slane %v597, %v601
        %vm604 = vcmask 261120
        %v606 = vsel %vm604, %v585, 0
        %608 = vmatprep.subr.mxu0 0.0
        %609 = vmatpush1.msra.mxu0 0.0
        %610 = vmatprep.subr.mxu0 0.0
        %611 = vmatpush1.msra.mxu0 0.0
        %612 = vmatprep.subr.mxu0 0.0
        %613 = vmatpush1.msra.mxu0 0.0
        %614 = vmatprep.subr.mxu0 0.0
        %615 = vmatpush1.msra.mxu0 0.0
        %616 = vmatprep.subr.mxu0 0.0
        %617 = vmatpush1.msra.mxu0 0.0
        %618 = vmatprep.subr.mxu0 0.0
        %619 = vmatpush1.msra.mxu0 0.0
        %620 = vmatprep.subr.mxu0 0.0
        %621 = vmatpush1.msra.mxu0 0.0
        %622 = vmatprep.subr.mxu0 0.0
        %623 = vmatpush1.msra.mxu0 0.0
        %624 = vmatprep.subr.mxu0 0.0
        %625 = vmatpush1.msra.mxu0 0.0
        %626 = vmatprep.subr.mxu0 0.0
        %627 = vmatpush1.msra.mxu0 0.0
        %628 = vmatprep.subr.mxu0 0.0
        %629 = vmatpush1.msra.mxu0 0.0
        %630 = vmatprep.subr.mxu0 0.0
        %631 = vmatpush1.msra.mxu0 0.0
        %632 = vmatprep.subr.mxu0 0.0
        %633 = vmatpush1.msra.mxu0 %v596
        %634 = vmatprep.subr.mxu0 0.0
        %635 = vmatpush1.msra.mxu0 %v595
        %636 = vmatprep.subr.mxu0 0.0
        %637 = vmatpush1.msra.mxu0 %v594
        %638 = vmatprep.subr.mxu0 0.0
        %639 = vmatpush1.msra.mxu0 %v593
        %640 = vmatprep.subr.mxu0 0.0
        %641 = vmatpush2.msra.mxu0 0.0
        %642 = vmatprep.subr.mxu0 0.0
        %643 = vmatpush2.msra.mxu0 0.0
        %644 = vmatprep.subr.mxu0 0.0
        %645 = vmatpush2.msra.mxu0 0.0
        %646 = vmatprep.subr.mxu0 0.0
        %647 = vmatpush2.msra.mxu0 0.0
        %648 = vmatprep.subr.mxu0 0.0
        %649 = vmatpush2.msra.mxu0 0.0
        %650 = vmatprep.subr.mxu0 0.0
        %651 = vmatpush2.msra.mxu0 0.0
        %652 = vmatprep.subr.mxu0 0.0
        %653 = vmatpush2.msra.mxu0 0.0
        %654 = vmatprep.subr.mxu0 0.0
        %655 = vmatpush2.msra.mxu0 0.0
        %656 = vmatprep.subr.mxu0 0.0
        %657 = vmatpush2.msra.mxu0 0.0
        %658 = vmatprep.subr.mxu0 0.0
        %659 = vmatpush2.msra.mxu0 0.0
        %660 = vmatprep.subr.mxu0 0.0
        %661 = vmatpush2.msra.mxu0 0.0
        %662 = vmatprep.subr.mxu0 0.0
        %663 = vmatpush2.msra.mxu0 0.0
        %664 = vmatprep.subr.mxu0 0.0
        %665 = vmatpush2.msra.mxu0 0.0
        %666 = vmatprep.subr.mxu0 0.0
        %667 = vmatpush2.msra.mxu0 0.0
        %668 = vmatprep.subr.mxu0 0.0
        %669 = vmatpush2.msra.mxu0 0.0
        %670 = vmatprep.subr.mxu0 0.0
        %671 = vmatpush2.msra.mxu0 0.0
        %672 = vmatprep.mubr.f32.mxu0 0.0
        %673 = vmatmul.mubr.f32.gmra.mxu0 %v606
        %v674 = vpop.f32.mrf.mxu0
        %v675 = vadd.f32 %v602, %v674
        %v676 = vpop.f32.mrf.mxu0
        %677 = vdwg.mxu0
        %v678 = vld [vmem:[#allocation10] sm:$0xff]
        %v679 = vld [vmem:[#allocation10 + $0x8] sm:$0xff]
        %v680 = vld [vmem:[#allocation10 + $0x10] sm:$0xff]
        %v681 = vld [vmem:[#allocation10 + $0x18] sm:$0xff]
        %v682 = vld [vmem:[%s7] sm:$0x1]
        %v684 = vlaneseq
        %v685 = vshrl.u32 %v684, 7
        %v686 = vsub.s32 0, %v685
        %v687 = vrot.slane %v682, %v686
        %v690 = vsel %vm604, %v586, 0
        %v693 = vsel %vm604, %v587, 0
        %695 = vmatprep.subr.mxu0 0.0
        %696 = vmatpush1.msra.mxu0 0.0
        %697 = vmatprep.subr.mxu0 0.0
        %698 = vmatpush1.msra.mxu0 0.0
        %699 = vmatprep.subr.mxu0 0.0
        %700 = vmatpush1.msra.mxu0 0.0
        %701 = vmatprep.subr.mxu0 0.0
        %702 = vmatpush1.msra.mxu0 0.0
        %703 = vmatprep.subr.mxu0 0.0
        %704 = vmatpush1.msra.mxu0 0.0
        %705 = vmatprep.subr.mxu0 0.0
        %706 = vmatpush1.msra.mxu0 0.0
        %707 = vmatprep.subr.mxu0 0.0
        %708 = vmatpush1.msra.mxu0 0.0
        %709 = vmatprep.subr.mxu0 0.0
        %710 = vmatpush1.msra.mxu0 0.0
        %711 = vmatprep.subr.mxu0 0.0
        %712 = vmatpush1.msra.mxu0 0.0
        %713 = vmatprep.subr.mxu0 0.0
        %714 = vmatpush1.msra.mxu0 0.0
        %715 = vmatprep.subr.mxu0 0.0
        %716 = vmatpush1.msra.mxu0 0.0
        %717 = vmatprep.subr.mxu0 0.0
        %718 = vmatpush1.msra.mxu0 0.0
        %719 = vmatprep.subr.mxu0 0.0
        %720 = vmatpush1.msra.mxu0 %v681
        %721 = vmatprep.subr.mxu0 0.0
        %722 = vmatpush1.msra.mxu0 %v680
        %723 = vmatprep.subr.mxu0 0.0
        %724 = vmatpush1.msra.mxu0 %v679
        %725 = vmatprep.subr.mxu0 0.0
        %726 = vmatpush1.msra.mxu0 %v678
        %727 = vmatprep.subr.mxu0 0.0
        %728 = vmatpush2.msra.mxu0 0.0
        %729 = vmatprep.subr.mxu0 0.0
        %730 = vmatpush2.msra.mxu0 0.0
        %731 = vmatprep.subr.mxu0 0.0
        %732 = vmatpush2.msra.mxu0 0.0
        %733 = vmatprep.subr.mxu0 0.0
        %734 = vmatpush2.msra.mxu0 0.0
        %735 = vmatprep.subr.mxu0 0.0
        %736 = vmatpush2.msra.mxu0 0.0
        %737 = vmatprep.subr.mxu0 0.0
        %738 = vmatpush2.msra.mxu0 0.0
        %739 = vmatprep.subr.mxu0 0.0
        %740 = vmatpush2.msra.mxu0 0.0
        %741 = vmatprep.subr.mxu0 0.0
        %742 = vmatpush2.msra.mxu0 0.0
        %743 = vmatprep.subr.mxu0 0.0
        %744 = vmatpush2.msra.mxu0 0.0
        %745 = vmatprep.subr.mxu0 0.0
        %746 = vmatpush2.msra.mxu0 0.0
        %747 = vmatprep.subr.mxu0 0.0
        %748 = vmatpush2.msra.mxu0 0.0
        %749 = vmatprep.subr.mxu0 0.0
        %750 = vmatpush2.msra.mxu0 0.0
        %751 = vmatprep.subr.mxu0 0.0
        %752 = vmatpush2.msra.mxu0 0.0
        %753 = vmatprep.subr.mxu0 0.0
        %754 = vmatpush2.msra.mxu0 0.0
        %755 = vmatprep.subr.mxu0 0.0
        %756 = vmatpush2.msra.mxu0 0.0
        %757 = vmatprep.subr.mxu0 0.0
        %758 = vmatpush2.msra.mxu0 0.0
        %759 = vmatprep.mubr.f32.mxu0 0.0
        %760 = vmatmul.mubr.f32.gmra.mxu0 %v690
        %v761 = vpop.f32.mrf.mxu0
        %v762 = vadd.f32 %v687, %v761
        %v763 = vpop.f32.mrf.mxu0
        %764 = vmatprep.mubr.f32.mxu0 0.0
        %765 = vmatmul.mubr.f32.gmra.mxu0 %v693
        %v766 = vpop.f32.mrf.mxu0
        %v767 = vadd.f32 %v687, %v766
        %v768 = vpop.f32.mrf.mxu0
        %769 = vdwg.mxu0
        %v774 = vlaneseq
        %v775 = vshrl.u32 %v774, 7
        %v776 = vsub.s32 0, %v775
        %v777 = vrot.slane %v589, %v776
        %v778 = vlaneseq
        %v779 = vshrl.u32 %v778, 7
        %v780 = vsub.s32 0, %v779
        %v781 = vrot.slane %v590, %v780
        %v782 = vlaneseq
        %v783 = vshrl.u32 %v782, 7
        %v784 = vsub.s32 0, %v783
        %v785 = vrot.slane %v591, %v784
        %v786 = vlaneseq
        %v787 = vshrl.u32 %v786, 7
        %v788 = vsub.s32 0, %v787
        %v789 = vrot.slane %v592, %v788
        %v794 = vmul.f32 %v675, %v777
        %v795 = vmul.f32 %v675, %v781
        %v796 = vmul.f32 %v675, %v785
        %v797 = vmul.f32 %v675, %v789
        %v799 = vlaneseq
        %v800 = vshrl.u32 %v799, 7
        %v801 = vsub.s32 0, %v800
        %v802 = vrot.slane %v588, %v801
        %v805 = vsel %vm604, %v794, 0
        %v808 = vsel %vm604, %v795, 0
        %v811 = vsel %vm604, %v796, 0
        %v814 = vsel %vm604, %v797, 0
        %v817 = vsel %vm604, %v762, 0
        %v820 = vsel %vm604, %v767, 0
        %822 = vmatprep.subr.mxu0 0.0
        %823 = vmatpush1.xpose.msra.mxu0 0.0
        %824 = vmatprep.subr.mxu0 0.0
        %825 = vmatpush1.xpose.msra.mxu0 0.0
        %826 = vmatprep.subr.mxu0 0.0
        %827 = vmatpush1.xpose.msra.mxu0 0.0
        %828 = vmatprep.subr.mxu0 0.0
        %829 = vmatpush1.xpose.msra.mxu0 0.0
        %830 = vmatprep.subr.mxu0 0.0
        %831 = vmatpush1.xpose.msra.mxu0 0.0
        %832 = vmatprep.subr.mxu0 0.0
        %833 = vmatpush1.xpose.msra.mxu0 0.0
        %834 = vmatprep.subr.mxu0 0.0
        %835 = vmatpush1.xpose.msra.mxu0 0.0
        %836 = vmatprep.subr.mxu0 0.0
        %837 = vmatpush1.xpose.msra.mxu0 0.0
        %838 = vmatprep.subr.mxu0 0.0
        %839 = vmatpush1.xpose.msra.mxu0 0.0
        %840 = vmatprep.subr.mxu0 0.0
        %841 = vmatpush1.xpose.msra.mxu0 0.0
        %842 = vmatprep.subr.mxu0 0.0
        %843 = vmatpush1.xpose.msra.mxu0 0.0
        %844 = vmatprep.subr.mxu0 0.0
        %845 = vmatpush1.xpose.msra.mxu0 0.0
        %846 = vmatprep.subr.mxu0 0.0
        %847 = vmatpush1.xpose.msra.mxu0 0.0
        %848 = vmatprep.subr.mxu0 0.0
        %849 = vmatpush1.xpose.msra.mxu0 0.0
        %850 = vmatprep.subr.mxu0 0.0
        %851 = vmatpush1.xpose.msra.mxu0 %v820
        %852 = vmatprep.subr.mxu0 0.0
        %853 = vmatpush1.xpose.msra.mxu0 %v817
        %854 = vmatprep.subr.mxu0 0.0
        %855 = vmatpush2.xpose.msra.mxu0 0.0
        %856 = vmatprep.subr.mxu0 0.0
        %857 = vmatpush2.xpose.msra.mxu0 0.0
        %858 = vmatprep.subr.mxu0 0.0
        %859 = vmatpush2.xpose.msra.mxu0 0.0
        %860 = vmatprep.subr.mxu0 0.0
        %861 = vmatpush2.xpose.msra.mxu0 0.0
        %862 = vmatprep.subr.mxu0 0.0
        %863 = vmatpush2.xpose.msra.mxu0 0.0
        %864 = vmatprep.subr.mxu0 0.0
        %865 = vmatpush2.xpose.msra.mxu0 0.0
        %866 = vmatprep.subr.mxu0 0.0
        %867 = vmatpush2.xpose.msra.mxu0 0.0
        %868 = vmatprep.subr.mxu0 0.0
        %869 = vmatpush2.xpose.msra.mxu0 0.0
        %870 = vmatprep.subr.mxu0 0.0
        %871 = vmatpush2.xpose.msra.mxu0 0.0
        %872 = vmatprep.subr.mxu0 0.0
        %873 = vmatpush2.xpose.msra.mxu0 0.0
        %874 = vmatprep.subr.mxu0 0.0
        %875 = vmatpush2.xpose.msra.mxu0 0.0
        %876 = vmatprep.subr.mxu0 0.0
        %877 = vmatpush2.xpose.msra.mxu0 0.0
        %878 = vmatprep.subr.mxu0 0.0
        %879 = vmatpush2.xpose.msra.mxu0 0.0
        %880 = vmatprep.subr.mxu0 0.0
        %881 = vmatpush2.xpose.msra.mxu0 0.0
        %882 = vmatprep.subr.mxu0 0.0
        %883 = vmatpush2.xpose.msra.mxu0 0.0
        %884 = vmatprep.subr.mxu0 0.0
        %885 = vmatpush2.xpose.msra.mxu0 0.0
        %886 = vmatprep.mubr.f32.mxu0 0.0
        %887 = vmatmul.mubr.f32.gmra.mxu0 %v805
        %v888 = vpop.f32.mrf.mxu0
        %v889 = vadd.f32 %v802, %v888
        %v890 = vpop.f32.mrf.mxu0
        %891 = vmatprep.mubr.f32.mxu0 0.0
        %892 = vmatmul.mubr.f32.gmra.mxu0 %v808
        %v893 = vpop.f32.mrf.mxu0
        %v894 = vadd.f32 %v802, %v893
        %v895 = vpop.f32.mrf.mxu0
        %896 = vmatprep.mubr.f32.mxu0 0.0
        %897 = vmatmul.mubr.f32.gmra.mxu0 %v811
        %v898 = vpop.f32.mrf.mxu0
        %v899 = vadd.f32 %v802, %v898
        %v900 = vpop.f32.mrf.mxu0
        %901 = vmatprep.mubr.f32.mxu0 0.0
        %902 = vmatmul.mubr.f32.gmra.mxu0 %v814
        %v903 = vpop.f32.mrf.mxu0
        %v904 = vadd.f32 %v802, %v903
        %v905 = vpop.f32.mrf.mxu0
        %906 = vdwg.mxu0
        %vm907 = vcmask 130048
        %908 = vst.msk [vmem:[%s583] sm:$0xff] %vm907, %v889
        %909 = vst.msk [vmem:[%s583 + $0x8] sm:$0xff] %vm907, %v894
        %910 = vst.msk [vmem:[%s583 + $0x10] sm:$0xff] %vm907, %v899
        %911 = vst.msk [vmem:[%s583 + $0x18] sm:$0xff] %vm907, %v904
        %v912 = vsel %vm907, %v889, -inf
        %913 = vmax.xlane.f32.xlu0 %v912
        %v914 = vpop.xlane.xlu0 %913
        %v915 = vsel %vm907, %v894, -inf
        %916 = vmax.xlane.f32.xlu0 %v915
        %v917 = vpop.xlane.xlu0 %916
        %v918 = vsel %vm907, %v899, -inf
        %919 = vmax.xlane.f32.xlu0 %v918
        %v920 = vpop.xlane.xlu0 %919
        %v921 = vsel %vm907, %v904, -inf
        %922 = vmax.xlane.f32.xlu0 %v921
        %v923 = vpop.xlane.xlu0 %922
        %v924 = vsub.f32 %v889, %v914
        %v925 = vsub.f32 %v894, %v917
        %v926 = vsub.f32 %v899, %v920
        %v927 = vsub.f32 %v904, %v923
        %v928 = vmul.f32 %v924, 1.442695
        %v929 = vpow.pop %v928
        %v930 = vmul.f32 %v925, 1.442695
        %v931 = vpow.pop %v930
        %v932 = vmul.f32 %v926, 1.442695
        %v933 = vpow.pop %v932
        %v934 = vmul.f32 %v927, 1.442695
        %v935 = vpow.pop %v934
        %v936 = vsel %vm907, %v929, 0.0
        %937 = vadd.xlane.f32.xlu0 %v936
        %v938 = vpop.xlane.xlu0 %937
        %v939 = vsel %vm907, %v931, 0.0
        %940 = vadd.xlane.f32.xlu0 %v939
        %v941 = vpop.xlane.xlu0 %940
        %v942 = vsel %vm907, %v933, 0.0
        %943 = vadd.xlane.f32.xlu0 %v942
        %v944 = vpop.xlane.xlu0 %943
        %v945 = vsel %vm907, %v935, 0.0
        %946 = vadd.xlane.f32.xlu0 %v945
        %v947 = vpop.xlane.xlu0 %946
        %v948 = vrcp.pop %v938
        %v949 = vrcp.pop %v941
        %v950 = vrcp.pop %v944
        %v951 = vrcp.pop %v947
        %v952 = vmul.f32 %v929, %v948
        %v953 = vmul.f32 %v931, %v949
        %v954 = vmul.f32 %v933, %v950
        %v955 = vmul.f32 %v935, %v951
        %956 = vrot.lane.b32.xlu0 %v762, 96
        %v957 = vpop.permute.xlu0 %956
        %958 = vrot.lane.b32.xlu0 %v767, 96
        %v959 = vpop.permute.xlu0 %958
        %v963 = vsel %vm907, %v952, 0
        %v966 = vsel %vm907, %v953, 0
        %v969 = vsel %vm907, %v954, 0
        %v972 = vsel %vm907, %v955, 0
        %974 = vmatprep.subr.mxu0 0.0
        %975 = vmatpush1.msra.mxu0 0.0
        %976 = vmatprep.subr.mxu0 0.0
        %977 = vmatpush1.msra.mxu0 0.0
        %978 = vmatprep.subr.mxu0 0.0
        %979 = vmatpush1.msra.mxu0 0.0
        %980 = vmatprep.subr.mxu0 0.0
        %981 = vmatpush1.msra.mxu0 0.0
        %982 = vmatprep.subr.mxu0 0.0
        %983 = vmatpush1.msra.mxu0 0.0
        %984 = vmatprep.subr.mxu0 0.0
        %985 = vmatpush1.msra.mxu0 0.0
        %986 = vmatprep.subr.mxu0 0.0
        %987 = vmatpush1.msra.mxu0 0.0
        %988 = vmatprep.subr.mxu0 0.0
        %989 = vmatpush1.msra.mxu0 0.0
        %990 = vmatprep.subr.mxu0 0.0
        %991 = vmatpush1.msra.mxu0 0.0
        %992 = vmatprep.subr.mxu0 0.0
        %993 = vmatpush1.msra.mxu0 0.0
        %994 = vmatprep.subr.mxu0 0.0
        %995 = vmatpush1.msra.mxu0 0.0
        %996 = vmatprep.subr.mxu0 0.0
        %997 = vmatpush1.msra.mxu0 0.0
        %998 = vmatprep.subr.mxu0 0.0
        %999 = vmatpush1.msra.mxu0 0.0
        %1000 = vmatprep.subr.mxu0 0.0
        %1001 = vmatpush1.msra.mxu0 0.0
        %1002 = vmatprep.subr.mxu0 0.0
        %1003 = vmatpush1.msra.mxu0 %v959
        %1004 = vmatprep.subr.mxu0 0.0
        %1005 = vmatpush1.msra.mxu0 %v957
        %1006 = vmatprep.subr.mxu0 0.0
        %1007 = vmatpush2.msra.mxu0 0.0
        %1008 = vmatprep.subr.mxu0 0.0
        %1009 = vmatpush2.msra.mxu0 0.0
        %1010 = vmatprep.subr.mxu0 0.0
        %1011 = vmatpush2.msra.mxu0 0.0
        %1012 = vmatprep.subr.mxu0 0.0
        %1013 = vmatpush2.msra.mxu0 0.0
        %1014 = vmatprep.subr.mxu0 0.0
        %1015 = vmatpush2.msra.mxu0 0.0
        %1016 = vmatprep.subr.mxu0 0.0
        %1017 = vmatpush2.msra.mxu0 0.0
        %1018 = vmatprep.subr.mxu0 0.0
        %1019 = vmatpush2.msra.mxu0 0.0
        %1020 = vmatprep.subr.mxu0 0.0
        %1021 = vmatpush2.msra.mxu0 0.0
        %1022 = vmatprep.subr.mxu0 0.0
        %1023 = vmatpush2.msra.mxu0 0.0
        %1024 = vmatprep.subr.mxu0 0.0
        %1025 = vmatpush2.msra.mxu0 0.0
        %1026 = vmatprep.subr.mxu0 0.0
        %1027 = vmatpush2.msra.mxu0 0.0
        %1028 = vmatprep.subr.mxu0 0.0
        %1029 = vmatpush2.msra.mxu0 0.0
        %1030 = vmatprep.subr.mxu0 0.0
        %1031 = vmatpush2.msra.mxu0 0.0
        %1032 = vmatprep.subr.mxu0 0.0
        %1033 = vmatpush2.msra.mxu0 0.0
        %1034 = vmatprep.subr.mxu0 0.0
        %1035 = vmatpush2.msra.mxu0 0.0
        %1036 = vmatprep.subr.mxu0 0.0
        %1037 = vmatpush2.msra.mxu0 0.0
        %1038 = vmatprep.mubr.f32.mxu0 0.0
        %1039 = vmatmul.mubr.f32.gmra.mxu0 %v963
        %v1040 = vpop.f32.mrf.mxu0
        %v1041 = vadd.f32 0.0, %v1040
        %v1042 = vpop.f32.mrf.mxu0
        %1043 = vmatprep.mubr.f32.mxu0 0.0
        %1044 = vmatmul.mubr.f32.gmra.mxu0 %v966
        %v1045 = vpop.f32.mrf.mxu0
        %v1046 = vadd.f32 0.0, %v1045
        %v1047 = vpop.f32.mrf.mxu0
        %1048 = vmatprep.mubr.f32.mxu0 0.0
        %1049 = vmatmul.mubr.f32.gmra.mxu0 %v969
        %v1050 = vpop.f32.mrf.mxu0
        %v1051 = vadd.f32 0.0, %v1050
        %v1052 = vpop.f32.mrf.mxu0
        %1053 = vmatprep.mubr.f32.mxu0 0.0
        %1054 = vmatmul.mubr.f32.gmra.mxu0 %v972
        %v1055 = vpop.f32.mrf.mxu0
        %v1056 = vadd.f32 0.0, %v1055
        %v1057 = vpop.f32.mrf.mxu0
        %1058 = vdwg.mxu0
        %v1059 = vmul.f32 %v1041, %v777
        %v1060 = vmul.f32 %v1046, %v781
        %v1061 = vmul.f32 %v1051, %v785
        %v1062 = vmul.f32 %v1056, %v789
        %v1063 = vsel %vm604, %v1059, 0.0
        %v1064 = vsel %vm604, %v1060, 0.0
        %v1065 = vadd.f32 %v1063, %v1064
        %v1066 = vsel %vm604, %v1061, 0.0
        %v1067 = vadd.f32 %v1065, %v1066
        %v1068 = vsel %vm604, %v1062, 0.0
        %v1069 = vadd.f32 %v1067, %v1068
        %v1070 = vld [vmem:[#allocation11] sm:$0xff]
        %v1071 = vld [vmem:[#allocation11 + $0x8] sm:$0xff]
        %v1072 = vld [vmem:[#allocation11 + $0x10] sm:$0xff]
        %v1073 = vld [vmem:[#allocation11 + $0x18] sm:$0xff]
        %v1074 = vld [vmem:[%s9] sm:$0x1]
        %v1076 = vlaneseq
        %v1077 = vshrl.u32 %v1076, 7
        %v1078 = vsub.s32 0, %v1077
        %v1079 = vrot.slane %v1074, %v1078
        %v1082 = vsel %vm604, %v1069, 0
        %1084 = vmatprep.subr.mxu0 0.0
        %1085 = vmatpush1.msra.mxu0 0.0
        %1086 = vmatprep.subr.mxu0 0.0
        %1087 = vmatpush1.msra.mxu0 0.0
        %1088 = vmatprep.subr.mxu0 0.0
        %1089 = vmatpush1.msra.mxu0 0.0
        %1090 = vmatprep.subr.mxu0 0.0
        %1091 = vmatpush1.msra.mxu0 0.0
        %1092 = vmatprep.subr.mxu0 0.0
        %1093 = vmatpush1.msra.mxu0 0.0
        %1094 = vmatprep.subr.mxu0 0.0
        %1095 = vmatpush1.msra.mxu0 0.0
        %1096 = vmatprep.subr.mxu0 0.0
        %1097 = vmatpush1.msra.mxu0 0.0
        %1098 = vmatprep.subr.mxu0 0.0
        %1099 = vmatpush1.msra.mxu0 0.0
        %1100 = vmatprep.subr.mxu0 0.0
        %1101 = vmatpush1.msra.mxu0 0.0
        %1102 = vmatprep.subr.mxu0 0.0
        %1103 = vmatpush1.msra.mxu0 0.0
        %1104 = vmatprep.subr.mxu0 0.0
        %1105 = vmatpush1.msra.mxu0 0.0
        %1106 = vmatprep.subr.mxu0 0.0
        %1107 = vmatpush1.msra.mxu0 0.0
        %1108 = vmatprep.subr.mxu0 0.0
        %1109 = vmatpush1.msra.mxu0 %v1073
        %1110 = vmatprep.subr.mxu0 0.0
        %1111 = vmatpush1.msra.mxu0 %v1072
        %1112 = vmatprep.subr.mxu0 0.0
        %1113 = vmatpush1.msra.mxu0 %v1071
        %1114 = vmatprep.subr.mxu0 0.0
        %1115 = vmatpush1.msra.mxu0 %v1070
        %1116 = vmatprep.subr.mxu0 0.0
        %1117 = vmatpush2.msra.mxu0 0.0
        %1118 = vmatprep.subr.mxu0 0.0
        %1119 = vmatpush2.msra.mxu0 0.0
        %1120 = vmatprep.subr.mxu0 0.0
        %1121 = vmatpush2.msra.mxu0 0.0
        %1122 = vmatprep.subr.mxu0 0.0
        %1123 = vmatpush2.msra.mxu0 0.0
        %1124 = vmatprep.subr.mxu0 0.0
        %1125 = vmatpush2.msra.mxu0 0.0
        %1126 = vmatprep.subr.mxu0 0.0
        %1127 = vmatpush2.msra.mxu0 0.0
        %1128 = vmatprep.subr.mxu0 0.0
        %1129 = vmatpush2.msra.mxu0 0.0
        %1130 = vmatprep.subr.mxu0 0.0
        %1131 = vmatpush2.msra.mxu0 0.0
        %1132 = vmatprep.subr.mxu0 0.0
        %1133 = vmatpush2.msra.mxu0 0.0
        %1134 = vmatprep.subr.mxu0 0.0
        %1135 = vmatpush2.msra.mxu0 0.0
        %1136 = vmatprep.subr.mxu0 0.0
        %1137 = vmatpush2.msra.mxu0 0.0
        %1138 = vmatprep.subr.mxu0 0.0
        %1139 = vmatpush2.msra.mxu0 0.0
        %1140 = vmatprep.subr.mxu0 0.0
        %1141 = vmatpush2.msra.mxu0 0.0
        %1142 = vmatprep.subr.mxu0 0.0
        %1143 = vmatpush2.msra.mxu0 0.0
        %1144 = vmatprep.subr.mxu0 0.0
        %1145 = vmatpush2.msra.mxu0 0.0
        %1146 = vmatprep.subr.mxu0 0.0
        %1147 = vmatpush2.msra.mxu0 0.0
        %1148 = vmatprep.mubr.f32.mxu0 0.0
        %1149 = vmatmul.mubr.f32.gmra.mxu0 %v1082
        %v1150 = vpop.f32.mrf.mxu0
        %v1151 = vadd.f32 %v1079, %v1150
        %v1152 = vpop.f32.mrf.mxu0
        %1153 = vdwg.mxu0
        %v1154 = vadd.f32 %v1151, %v585
        %v1155 = vld [vmem:[%s10] sm:$0x1]
        %v1156 = vld [vmem:[%s11] sm:$0x1]
        %v1157 = vsel %vm604, %v1154, 0.0
        %1158 = vadd.xlane.f32.xlu0 %v1157
        %v1159 = vpop.xlane.xlu0 %1158
        %v1160 = vrcp.pop 32.0
        %v1161 = vmul.f32 %v1159, %v1160
        %v1162 = vsub.f32 %v1154, %v1161
        %v1163 = vmul.f32 %v1162, %v1162
        %v1164 = vsel %vm604, %v1163, 0.0
        %1165 = vadd.xlane.f32.xlu0 %v1164
        %v1166 = vpop.xlane.xlu0 %1165
        %v1167 = vmul.f32 %v1166, %v1160
        %v1168 = vadd.f32 %v1167, 1e-12
        %v1169 = vrsqrt.pop %v1168
        %v1170 = vmul.f32 %v1162, %v1169
        %v1172 = vlaneseq
        %v1173 = vshrl.u32 %v1172, 7
        %v1174 = vsub.s32 0, %v1173
        %v1175 = vrot.slane %v1155, %v1174
        %v1177 = vmul.f32 %v1170, %v1175
        %v1179 = vlaneseq
        %v1180 = vshrl.u32 %v1179, 7
        %v1181 = vsub.s32 0, %v1180
        %v1182 = vrot.slane %v1156, %v1181
        %v1184 = vadd.f32 %v1177, %v1182
        %1185 = vst.msk [vmem:[%s571] sm:$0xff] %vm604, %v1184
        %s1186 = sand.u32 %s311, 1
        %s1187 = scalar_lea.sflag [#allocation4], %s1186
        %s1188 = sand.u32 %s311, 1
        %s1189 = smul.addr %s1188, 8
        %s1190 = scalar_lea.vmem [#allocation13], %s1189
        %s1191 = smul.u32 4, %s36
        %p1192 = scmp.lt.s32.totalorder %s1191, 7
        %s1193 = scalar_select %p1192, %s1191, 7
        %s1194 = smul.addr %s1193, 8
        %s1195 = scalar_lea.vmem %s13, %s1194
        // Predicated region
        $region93: #{tpu_custom_call.1} parent=67 // pred_check
          %p1196 = pneg %p321
        $region94: #{tpu_custom_call.1} parent=67 // pred_check_branch
          %1198 = sbr.rel (%p1196) target = $region96
        $region95: #{tpu_custom_call.1} parent=67 // pred_region
          %s1200 = ssub.s32 128, 128
          %1201 = vsyncadd %s1187, %s1200
          %s1202 = smul.addr %s36, 128
          %s1203 = scalar_lea.hbm %s12, %s1202
          %s1205 = sshll.u32 %s1190, 4
          %s1206 = int_to_ptr.vmem [resolvable:$true] %s1205
          %1208 = dma.vmem_to_hbm [thread:$0]  %s1206, 128, %s1203, %s1187
        $region96: #{tpu_custom_call.1} parent=67 // pred_fallthru
          _
        // Predicated region
        $region97: #{tpu_custom_call.1} parent=67 // pred_check
          %p1209 = pneg %p347
        $region98: #{tpu_custom_call.1} parent=67 // pred_check_branch
          %1211 = sbr.rel (%p1209) target = $region100
        $region99: #{tpu_custom_call.1} parent=67 // pred_region
          %s1212 = smul.u32 4, %s36
        $region100: #{tpu_custom_call.1} parent=67 // pred_fallthru
          _
      $region68: #{tpu_custom_call.1} parent=5 // pred_fallthru
        _
      %p1213 = scmp.le.s32.totalorder 2, %s31
      // Predicated region
      $region101: #{tpu_custom_call.1} parent=5 // pred_check
        %p1214 = pneg %p1213
      $region102: #{tpu_custom_call.1} parent=5 // pred_check_branch
        %1216 = sbr.rel (%p1214) target = $region104
      $region103: #{tpu_custom_call.1} parent=5 // pred_region
        %s1217 = ssub.s32 %s31, 2
        // Predicated region
        $region105: #{tpu_custom_call.1} parent=103 // pred_check
          %p1218 = pneg %p327
        $region106: #{tpu_custom_call.1} parent=103 // pred_check_branch
          %1220 = sbr.rel (%p1218) target = $region108
        $region107: #{tpu_custom_call.1} parent=103 // pred_region
          %s1221 = sand.u32 %s312, 1
          %s1222 = scalar_lea.sflag [#allocation4], %s1221
          %s1223 = sand.u32 %s312, 1
          %s1224 = smul.addr %s1223, 8
          %s1225 = scalar_lea.vmem [#allocation13], %s1224
          %1226 = dma.done %s1222, 128
        $region108: #{tpu_custom_call.1} parent=103 // pred_fallthru
          _
        // Predicated region
        $region109: #{tpu_custom_call.1} parent=103 // pred_check
          %p1227 = pneg %p353
        $region110: #{tpu_custom_call.1} parent=103 // pred_check_branch
          %1229 = sbr.rel (%p1227) target = $region112
        $region111: #{tpu_custom_call.1} parent=103 // pred_region
          %s1230 = smul.u32 4, %s37
          %p1231 = scmp.lt.s32.totalorder %s1230, 7
          %s1232 = scalar_select %p1231, %s1230, 7
          %s1233 = smul.addr %s1232, 8
          %s1234 = scalar_lea.vmem %s13, %s1233
        $region112: #{tpu_custom_call.1} parent=103 // pred_fallthru
          _
      $region104: #{tpu_custom_call.1} parent=5 // pred_fallthru
        _
    $region6: #{tpu_custom_call.1} parent=1 // loop_footer
      %s35 = sadd.s32 1, %s31
    $region7: #{tpu_custom_call.1} parent=1 // loop_footer_branch
      %30 = sbr.rel target = $region3
    $region8: #{tpu_custom_call.1} parent=1 // loop_exit
      _
    %1235 = vsyncpa [#allocation3], 1
    %s1236 = scalar_lea.sflag [#allocation3], 1
    %1237 = vsyncpa %s1236, 1
    %1238 = vsyncpa [#allocation6], 1
    %s1239 = scalar_lea.sflag [#allocation6], 1
    %1240 = vsyncpa %s1239, 1
    %1241 = vsyncpa [#allocation9], 1
    %1242 = vsyncpa [#allocation12], 1
    %1243 = vsyncpa [#allocation4], 1
    %s1244 = scalar_lea.sflag [#allocation4], 1
    %1245 = vsyncpa %s1244, 1

</llo_original>
